<compile_context>
chip_gen: v7x
topology: tpu7x:2x2x1
jax: 0.10.0
libtpu: 0.0.40
codegen_flags: <defaults>
</compile_context>

<pallas_src>
import math

import jax
import jax.numpy as jnp
from jax import lax
from jax.experimental import pallas as pl
from jax.experimental.pallas import tpu as pltpu


# ----------------------------------------------------------------------------
# helpers
# ----------------------------------------------------------------------------
def _round_up(x, m):
    return ((x + m - 1) // m) * m


def _pad2(x, rows, cols):
    pr, pc = rows - x.shape[0], cols - x.shape[1]
    if pr == 0 and pc == 0:
        return x
    return jnp.pad(x, ((0, pr), (0, pc)))


def _flatten(feats):
    # (1, C, H, W) -> (C, H*W) f32
    assert feats.shape[0] == 1
    return feats.reshape(feats.shape[1], -1).astype(jnp.float32)


_VMEM_LIMIT = 32 * 1024 * 1024   # safe on v5e/v6e/v7x; tiles sized well below


# ----------------------------------------------------------------------------
# nnfm loss kernel: online argmin over style columns + cos_loss, tiled
# ----------------------------------------------------------------------------
def _make_nnfm_kernel(hwa_true, ta, tb, nb_tiles):
    def kernel(a_ref, b_ref, n_ref, o_ref, sbest, cbest):
        # pallas primitives only at top level (interpret-mode safe)
        i = pl.program_id(0)
        k = pl.program_id(1)
        row_base = i * ta

        @pl.when(k == 0)
        def _():
            sbest[...] = jnp.full(sbest.shape, -jnp.inf, jnp.float32)
            cbest[...] = jnp.zeros(cbest.shape, jnp.float32)

        # a_ref: (TA, Cp) bf16, pre-normalized queries (cos_loss convention)
        # b_ref: (Cp, TB) bf16, raw style keys
        m = jnp.dot(a_ref[...], b_ref[...],
                    preferred_element_type=jnp.float32)          # (TA, TB) f32

        nrm = n_ref[...]                                         # (8, TB) f32
        scale = nrm[0:1, :]     # 1/(sqrt(||b||^2+1e-8)+1e-8)  -> argmin score
        bias = nrm[1:2, :]      # 0 valid / -1e30 padded column
        cosmul = nrm[2:3, :]    # 1/(sqrt(||b||^2)+1e-8)       -> final cossim

        # argmin_j (1 - score) == argmax_j score (positive per-query a scale
        # dropped; it does not change the argmax).
        score = m * scale + bias                                 # (TA, TB)
        col = lax.broadcasted_iota(jnp.int32, (ta, tb), 1)
        tmax = jnp.max(score, axis=1, keepdims=True)             # (TA, 1)
        jloc = jnp.min(jnp.where(score == tmax, col, tb),
                       axis=1, keepdims=True)                    # first argmax
        hit = col == jloc
        c_sel = jnp.sum(jnp.where(hit, m * cosmul, 0.0),
                        axis=1, keepdims=True)                   # cossim @ argmax

        upd = tmax > sbest[...]        # strict > keeps earliest tile on ties
        sbest[...] = jnp.where(upd, tmax, sbest[...])
        cbest[...] = jnp.where(upd, c_sel, cbest[...])

        @pl.when(k == nb_tiles - 1)
        def _():
            row = lax.broadcasted_iota(jnp.int32, (ta, 1), 0) + row_base
            contrib = jnp.where(row < hwa_true, 1.0 - cbest[...], 0.0)
            part = jnp.sum(contrib)
            lane = lax.broadcasted_iota(jnp.int32, (1, 1, 128), 2)
            o_ref[...] = jnp.where(lane == 0, part, 0.0)         # lane-dense

    return kernel


def nnfm_loss_term(masked_feats, s_feats):
    """cos_loss(masked_feats, nn_feat_replace(masked_feats, s_feats))."""
    a = _flatten(masked_feats)                  # (C, HWa) queries
    b = _flatten(s_feats)                       # (C, HWb) style keys
    c = a.shape[0]
    assert b.shape[0] == c
    hwa, hwb = a.shape[1], b.shape[1]

    cp = _round_up(c, 32)
    ta = min(512, _round_up(hwa, 128))
    tb = min(512, _round_up(hwb, 128))
    hwa_p = _round_up(hwa, ta)
    hwb_p = _round_up(hwb, tb)
    na_tiles = hwa_p // ta
    nb_tiles = hwb_p // tb

    # query side: cos_loss normalisation folded in once, (HWa, C) bf16
    a_norm = jnp.sqrt(jnp.sum(a * a, axis=0, keepdims=True))
    a_hat = (a / (a_norm + 1e-8)).T
    a_hat_p = _pad2(a_hat, hwa_p, cp).astype(jnp.bfloat16)

    # key side: bf16 keys + precomputed per-column rows
    b_p = _pad2(b, cp, hwb_p).astype(jnp.bfloat16)
    bsq = jnp.sum(b * b, axis=0)                                  # (HWb,)
    scale = 1.0 / (jnp.sqrt(bsq + 1e-8) + 1e-8)                   # argmin norm
    cosmul = 1.0 / (jnp.sqrt(bsq) + 1e-8)                         # cossim norm
    valid = jnp.arange(hwb_p) < hwb
    rows = jnp.zeros((8, hwb_p), jnp.float32)
    rows = rows.at[0, :hwb].set(scale)
    rows = rows.at[1, :].set(jnp.where(valid, 0.0, -1e30))
    rows = rows.at[2, :hwb].set(cosmul)

    kernel = _make_nnfm_kernel(hwa, ta, tb, nb_tiles)
    partial = pl.pallas_call(
        kernel,
        out_shape=jax.ShapeDtypeStruct((na_tiles, 1, 128), jnp.float32),
        grid=(na_tiles, nb_tiles),
        in_specs=[pl.BlockSpec((ta, cp), lambda i, k: (i, 0)),
                  pl.BlockSpec((cp, tb), lambda i, k: (0, k)),
                  pl.BlockSpec((8, tb), lambda i, k: (0, k))],
        out_specs=pl.BlockSpec((1, 1, 128), lambda i, k: (i, 0, 0)),
        scratch_shapes=[pltpu.VMEM((ta, 1), jnp.float32),   # running best score
                        pltpu.VMEM((ta, 1), jnp.float32)],  # running best cossim
        compiler_params=pltpu.CompilerParams(
            dimension_semantics=("parallel", "arbitrary"),
            vmem_limit_bytes=_VMEM_LIMIT),
    )(a_hat_p, b_p, rows)
    return jnp.sum(partial) / hwa


# ----------------------------------------------------------------------------
# gram matrix kernel (accumulated over HW tiles, row-blocked output)
# ----------------------------------------------------------------------------
def _gram_kernel(xr_ref, xt_ref, g_ref):
    k = pl.program_id(1)

    @pl.when(k == 0)
    def _():
        g_ref[...] = jnp.zeros_like(g_ref)

    g_ref[...] += jnp.dot(xr_ref[...], xt_ref[...],
                          preferred_element_type=jnp.float32)


def _gram(x):
    """x: (C, HW) f32 -> (Cp, Cp) gram (zero-padded rows/cols beyond C)."""
    c, hw = x.shape
    cp = _round_up(c, 32)
    t = min(2048, _round_up(hw, 128))
    hw_p = _round_up(hw, t)
    x_p = _pad2(x, cp, hw_p).astype(jnp.bfloat16)     # (cp, hw_p)
    xt_p = x_p.T                                      # (hw_p, cp) canonical RHS
    n_hw = hw_p // t
    tc = 128 if cp % 128 == 0 else cp                 # output row block
    n_rb = cp // tc
    return pl.pallas_call(
        _gram_kernel,
        out_shape=jax.ShapeDtypeStruct((cp, cp), jnp.float32),
        grid=(n_rb, n_hw),
        in_specs=[pl.BlockSpec((tc, t), lambda i, k: (i, k)),
                  pl.BlockSpec((t, cp), lambda i, k: (k, 0))],
        out_specs=pl.BlockSpec((tc, cp), lambda i, k: (i, 0)),
        compiler_params=pltpu.CompilerParams(
            dimension_semantics=("parallel", "arbitrary"),
            vmem_limit_bytes=_VMEM_LIMIT),
    )(x_p, xt_p)


# ----------------------------------------------------------------------------
# tiled sum-of-squared-difference kernel (content loss, gram diff)
# ----------------------------------------------------------------------------
def _sqdiff_kernel(x_ref, y_ref, o_ref):
    d = x_ref[...] - y_ref[...]
    part = jnp.sum(d * d)
    lane = lax.broadcasted_iota(jnp.int32, (1, 1, 128), 2)
    o_ref[...] = jnp.where(lane == 0, part, 0.0)


def _sq_diff_mean(x, y, true_count):
    assert x.shape == y.shape
    r, n = x.shape
    t = min(1024, _round_up(n, 128))
    n_p = _round_up(n, t)
    x_p = _pad2(x, r, n_p)
    y_p = _pad2(y, r, n_p)
    n_tiles = n_p // t
    out = pl.pallas_call(
        _sqdiff_kernel,
        out_shape=jax.ShapeDtypeStruct((n_tiles, 1, 128), jnp.float32),
        grid=(n_tiles,),
        in_specs=[pl.BlockSpec((r, t), lambda k: (0, k)),
                  pl.BlockSpec((r, t), lambda k: (0, k))],
        out_specs=pl.BlockSpec((1, 1, 128), lambda k: (k, 0, 0)),
        compiler_params=pltpu.CompilerParams(
            dimension_semantics=("parallel",),
            vmem_limit_bytes=_VMEM_LIMIT),
    )(x_p, y_p)
    return jnp.sum(out) / true_count


def gram_loss_term(masked_feats, s_feats):
    """mean((gram_matrix_mask(masked) - gram_matrix(style))^2)."""
    a = _flatten(masked_feats)
    s = _flatten(s_feats)
    c = a.shape[0]
    ga = _gram(a)
    gs = _gram(s)
    return _sq_diff_mean(ga, gs, c * c)      # padded rows/cols cancel (both 0)


def content_loss_term(content_feats, x_feats):
    """mean((content_feats - x_feats)^2)."""
    x = _flatten(content_feats)
    y = _flatten(x_feats)
    return _sq_diff_mean(x, y, x.shape[0] * x.shape[1])


# ----------------------------------------------------------------------------
# NNFMLoss module port
# ----------------------------------------------------------------------------
class NNFMLossPallas:
    """Pallas port of NNFMLoss.

    The pretrained torchvision VGG16 is replaced by a deterministic stack of
    3x3 conv + ReLU layers (same NCHW layout / layer-index bookkeeping); the
    SAM instance-mask pipeline is replaced by deterministic threshold masks.
    """

    BLOCK_INDEXES = [[1, 3], [6, 8], [11, 13, 15], [18, 20, 22], [25, 27, 29]]
    MEAN = jnp.asarray([0.485, 0.456, 0.406], jnp.float32)
    STD = jnp.asarray([0.229, 0.224, 0.225], jnp.float32)

    def __init__(self, key, num_layers=16, feat_channels=8):
        # TODO(synk): pretrained VGG16 weights cannot be loaded in-script;
        # deterministic surrogate conv weights are used instead.
        self.weights = []
        for i in range(num_layers):
            k = jax.random.fold_in(key, i)
            cin = 3 if i == 0 else feat_channels
            w = jax.random.normal(k, (feat_channels, cin, 3, 3), jnp.float32)
            w = w * (0.5 / math.sqrt(cin * 9))
            self.weights.append(w)

    # -- surrogate of self.vgg.features iteration -----------------------------
    def get_feats(self, x, layers):
        x = (x - self.MEAN[None, :, None, None]) / self.STD[None, :, None, None]
        final_ix = max(layers)
        outputs = []
        for ix, w in enumerate(self.weights):
            x = lax.conv_general_dilated(
                x, w, window_strides=(1, 1), padding="SAME",
                dimension_numbers=("NCHW", "OIHW", "NCHW"))
            x = jnp.maximum(x, 0.0)
            if ix in layers:
                outputs.append(x)
            if ix == final_ix:
                break
        return outputs

    # -- surrogate of sam_wrapper + merge_masks --------------------------------
    def _semantic_masks(self, contents):
        # TODO(synk): SAM segmentation is not reproducible in-script; use
        # deterministic intensity-threshold masks on the content image instead.
        intensity = jnp.mean(contents[0], axis=0)          # (H, W)
        m0 = intensity > 0.5
        m1 = jnp.logical_not(m0)
        return jnp.stack([m0, m1], axis=0)                 # (n_masks, H, W)

    def forward(self, outputs, styles, blocks=(2,),
                loss_names=("nnfm_loss",), contents=None):
        for x in loss_names:
            assert x in ["nnfm_loss", "content_loss", "gram_loss"]
        blocks = sorted(blocks)
        all_layers = []
        for block in blocks:
            all_layers += self.BLOCK_INDEXES[block]

        masks_merged = self._semantic_masks(contents)
        assert masks_merged.shape[0] <= styles.shape[0]

        loss_dict = {name: jnp.float32(0.0) for name in loss_names}
        ix_map = {b: a for a, b in enumerate(all_layers)}

        for it in range(masks_merged.shape[0]):
            mask = masks_merged[it]                                    # (H, W)
            masked_outputs = jnp.where(mask[None, None], outputs, 0.0)
            unmasked_outputs = jnp.where(mask[None, None], 0.0, outputs)

            x_feats_all = self.get_feats(unmasked_outputs, all_layers)
            masked_x_feats_all = self.get_feats(masked_outputs, all_layers)
            s_feats_all = self.get_feats(styles[it:it + 1], all_layers)
            if "content_loss" in loss_names:
                content_feats_all = self.get_feats(contents, all_layers)

            for block in blocks:
                layers = self.BLOCK_INDEXES[block]
                x_feats = jnp.concatenate(
                    [x_feats_all[ix_map[ix]] for ix in layers], axis=1)
                s_feats = jnp.concatenate(
                    [s_feats_all[ix_map[ix]] for ix in layers], axis=1)
                masked_feats = jnp.concatenate(
                    [masked_x_feats_all[ix_map[ix]] for ix in layers], axis=1)

                if "nnfm_loss" in loss_names:
                    loss_dict["nnfm_loss"] += nnfm_loss_term(masked_feats, s_feats)
                if "gram_loss" in loss_names:
                    loss_dict["gram_loss"] += gram_loss_term(masked_feats, s_feats)
                if "content_loss" in loss_names:
                    content_feats = jnp.concatenate(
                        [content_feats_all[ix_map[ix]] for ix in layers], axis=1)
                    loss_dict["content_loss"] += content_loss_term(
                        content_feats, x_feats)
        return loss_dict


# ----------------------------------------------------------------------------
if __name__ == "__main__":
    key = jax.random.PRNGKey(0)
    k_out, k_content, k_style, k_w = jax.random.split(key, 4)

    outputs = jax.random.uniform(k_out, (1, 3, 16, 16), jnp.float32)
    contents = jax.random.uniform(k_content, (1, 3, 16, 16), jnp.float32)
    styles = jax.random.uniform(k_style, (2, 3, 16, 16), jnp.float32)

    model = NNFMLossPallas(k_w)
    loss_dict = model.forward(
        outputs, styles, blocks=[2],
        loss_names=["nnfm_loss", "gram_loss", "content_loss"],
        contents=contents)

    for name, val in loss_dict.items():
        val = jax.block_until_ready(val)
        assert jnp.isfinite(val), name
    print("KERNEL_OK")
</pallas_src>

<mosaic_0001>
module attributes {stable_mosaic.version = 11 : i64} {
  func.func @kernel(%arg0: i32, %arg1: i32, %arg2: memref<256x32xbf16, #tpu.memory_space<vmem>>, %arg3: memref<32x256xbf16, #tpu.memory_space<vmem>>, %arg4: memref<8x256xf32, #tpu.memory_space<vmem>>, %arg5: memref<1x1x128xf32, #tpu.memory_space<vmem>>, %arg6: memref<256x1xf32, #tpu.memory_space<vmem>>, %arg7: memref<256x1xf32, #tpu.memory_space<vmem>>) attributes {dimension_semantics = [#tpu.dimension_semantics<parallel>, #tpu.dimension_semantics<arbitrary>], iteration_bounds = array<i64: 1, 1>, scalar_prefetch = 0 : i64, scratch_operands = 2 : i64, tpu.core_type = #tpu.core_type<tc>, window_params = [{transform_indices = @transform_0, window_bounds = array<i64: 256, 32>}, {transform_indices = @transform_1, window_bounds = array<i64: 32, 256>}, {transform_indices = @transform_2, window_bounds = array<i64: 8, 256>}, {transform_indices = @transform_3, window_bounds = array<i64: 1, 1, 128>}]} {
    %c256_i32 = arith.constant 256 : i32
    %0 = arith.muli %arg0, %c256_i32 : i32
    %c0_i32 = arith.constant 0 : i32
    %1 = arith.cmpi eq, %arg1, %c0_i32 : i32
    %2 = arith.extui %1 : i1 to i32
    %c0_i32_0 = arith.constant 0 : i32
    %3 = arith.cmpi ne, %2, %c0_i32_0 : i32
    scf.if %3 {
      %cst_23 = arith.constant 0xFF800000 : f32
      %43 = vector.broadcast %cst_23 : f32 to vector<256x1xf32>
      %c0_24 = arith.constant 0 : index
      %c0_25 = arith.constant 0 : index
      %44 = vector.load %arg6[%c0_24, %c0_25] : memref<256x1xf32, #tpu.memory_space<vmem>>, vector<256x1xf32>
      tpu.vector_store %arg6[%c0_24, %c0_25], %43 {strides = array<i32>} : memref<256x1xf32, #tpu.memory_space<vmem>>, vector<256x1xf32>,
      %cst_26 = arith.constant 0.000000e+00 : f32
      %45 = vector.broadcast %cst_26 : f32 to vector<256x1xf32>
      %c0_27 = arith.constant 0 : index
      %c0_28 = arith.constant 0 : index
      %46 = vector.load %arg7[%c0_27, %c0_28] : memref<256x1xf32, #tpu.memory_space<vmem>>, vector<256x1xf32>
      tpu.vector_store %arg7[%c0_27, %c0_28], %45 {strides = array<i32>} : memref<256x1xf32, #tpu.memory_space<vmem>>, vector<256x1xf32>,
    } else {
    }
    %c0 = arith.constant 0 : index
    %c0_1 = arith.constant 0 : index
    %4 = vector.load %arg2[%c0, %c0_1] : memref<256x32xbf16, #tpu.memory_space<vmem>>, vector<256x32xbf16>
    %c0_2 = arith.constant 0 : index
    %c0_3 = arith.constant 0 : index
    %5 = vector.load %arg3[%c0_2, %c0_3] : memref<32x256xbf16, #tpu.memory_space<vmem>>, vector<32x256xbf16>
    %cst = arith.constant dense<0.000000e+00> : vector<256x256xf32>
    %6 = tpu.matmul %4, %5, %cst {dimension_numbers = #tpu.dot_dimension_numbers<[1], [0], [0], [1], [0, 0, 1, 1], [], []>} : vector<256x32xbf16>, vector<32x256xbf16>, vector<256x256xf32> -> vector<256x256xf32>
    %c0_4 = arith.constant 0 : index
    %c0_5 = arith.constant 0 : index
    %7 = vector.load %arg4[%c0_4, %c0_5] : memref<8x256xf32, #tpu.memory_space<vmem>>, vector<8x256xf32>
    %8 = vector.extract_strided_slice %7 {offsets = [0, 0], sizes = [1, 256], strides = [1, 1]} : vector<8x256xf32> to vector<1x256xf32>
    %9 = vector.extract_strided_slice %7 {offsets = [1, 0], sizes = [1, 256], strides = [1, 1]} : vector<8x256xf32> to vector<1x256xf32>
    %10 = vector.extract_strided_slice %7 {offsets = [2, 0], sizes = [1, 256], strides = [1, 1]} : vector<8x256xf32> to vector<1x256xf32>
    %11 = vector.broadcast %8 : vector<1x256xf32> to vector<256x256xf32>
    %12 = arith.mulf %6, %11 : vector<256x256xf32>
    %13 = vector.broadcast %9 : vector<1x256xf32> to vector<256x256xf32>
    %14 = arith.addf %12, %13 : vector<256x256xf32>
    %15 = tpu.iota {dimensions = array<i32: 1>} : vector<256x256xi32>
    %cst_6 = arith.constant dense<0xFF800000> : vector<256xf32>
    %16 = vector.multi_reduction <maximumf>, %14, %cst_6 [1] : vector<256x256xf32> to vector<256xf32>
    %17 = vector.shape_cast %16 : vector<256xf32> to vector<256x1xf32>
    %18 = vector.broadcast %17 : vector<256x1xf32> to vector<256x256xf32>
    %19 = arith.cmpf oeq, %14, %18 : vector<256x256xf32>
    %c256_i32_7 = arith.constant 256 : i32
    %20 = vector.broadcast %c256_i32_7 : i32 to vector<256x256xi32>
    %21 = arith.select %19, %15, %20 : vector<256x256xi1>, vector<256x256xi32>
    %cst_8 = arith.constant dense<2147483647> : vector<256xi32>
    %22 = vector.multi_reduction <minsi>, %21, %cst_8 [1] : vector<256x256xi32> to vector<256xi32>
    %23 = vector.shape_cast %22 : vector<256xi32> to vector<256x1xi32>
    %24 = vector.broadcast %23 : vector<256x1xi32> to vector<256x256xi32>
    %25 = arith.cmpi eq, %15, %24 : vector<256x256xi32>
    %26 = vector.broadcast %10 : vector<1x256xf32> to vector<256x256xf32>
    %27 = arith.mulf %6, %26 : vector<256x256xf32>
    %cst_9 = arith.constant 0.000000e+00 : f32
    %28 = vector.broadcast %cst_9 : f32 to vector<256x256xf32>
    %29 = arith.select %25, %27, %28 : vector<256x256xi1>, vector<256x256xf32>
    %cst_10 = arith.constant dense<0.000000e+00> : vector<256xf32>
    %30 = vector.multi_reduction <add>, %29, %cst_10 [1] : vector<256x256xf32> to vector<256xf32>
    %31 = vector.shape_cast %30 : vector<256xf32> to vector<256x1xf32>
    %c0_11 = arith.constant 0 : index
    %c0_12 = arith.constant 0 : index
    %32 = vector.load %arg6[%c0_11, %c0_12] : memref<256x1xf32, #tpu.memory_space<vmem>>, vector<256x1xf32>
    %33 = arith.cmpf ogt, %17, %32 : vector<256x1xf32>
    %c0_13 = arith.constant 0 : index
    %c0_14 = arith.constant 0 : index
    %34 = vector.load %arg6[%c0_13, %c0_14] : memref<256x1xf32, #tpu.memory_space<vmem>>, vector<256x1xf32>
    %35 = arith.select %33, %17, %34 : vector<256x1xi1>, vector<256x1xf32>
    %c0_15 = arith.constant 0 : index
    %c0_16 = arith.constant 0 : index
    %36 = vector.load %arg6[%c0_15, %c0_16] : memref<256x1xf32, #tpu.memory_space<vmem>>, vector<256x1xf32>
    tpu.vector_store %arg6[%c0_15, %c0_16], %35 {strides = array<i32>} : memref<256x1xf32, #tpu.memory_space<vmem>>, vector<256x1xf32>,
    %c0_17 = arith.constant 0 : index
    %c0_18 = arith.constant 0 : index
    %37 = vector.load %arg7[%c0_17, %c0_18] : memref<256x1xf32, #tpu.memory_space<vmem>>, vector<256x1xf32>
    %38 = arith.select %33, %31, %37 : vector<256x1xi1>, vector<256x1xf32>
    %c0_19 = arith.constant 0 : index
    %c0_20 = arith.constant 0 : index
    %39 = vector.load %arg7[%c0_19, %c0_20] : memref<256x1xf32, #tpu.memory_space<vmem>>, vector<256x1xf32>
    tpu.vector_store %arg7[%c0_19, %c0_20], %38 {strides = array<i32>} : memref<256x1xf32, #tpu.memory_space<vmem>>, vector<256x1xf32>,
    %c0_i32_21 = arith.constant 0 : i32
    %40 = arith.cmpi eq, %arg1, %c0_i32_21 : i32
    %41 = arith.extui %40 : i1 to i32
    %c0_i32_22 = arith.constant 0 : i32
    %42 = arith.cmpi ne, %41, %c0_i32_22 : i32
    scf.if %42 {
      %43 = tpu.iota {dimensions = array<i32: 0>} : vector<256x1xi32>
      %44 = vector.broadcast %0 : i32 to vector<256x1xi32>
      %45 = arith.addi %43, %44 : vector<256x1xi32>
      %c256_i32_23 = arith.constant 256 : i32
      %46 = vector.broadcast %c256_i32_23 : i32 to vector<256x1xi32>
      %47 = arith.cmpi slt, %45, %46 : vector<256x1xi32>
      %c0_24 = arith.constant 0 : index
      %c0_25 = arith.constant 0 : index
      %48 = vector.load %arg7[%c0_24, %c0_25] : memref<256x1xf32, #tpu.memory_space<vmem>>, vector<256x1xf32>
      %cst_26 = arith.constant 1.000000e+00 : f32
      %49 = vector.broadcast %cst_26 : f32 to vector<256x1xf32>
      %50 = arith.subf %49, %48 : vector<256x1xf32>
      %cst_27 = arith.constant 0.000000e+00 : f32
      %51 = vector.broadcast %cst_27 : f32 to vector<256x1xf32>
      %52 = arith.select %47, %50, %51 : vector<256x1xi1>, vector<256x1xf32>
      %53 = vector.shape_cast %52 : vector<256x1xf32> to vector<1x256x1xf32>
      %cst_28 = arith.constant dense<0.000000e+00> : vector<1xf32>
      %54 = vector.multi_reduction <add>, %53, %cst_28 [1, 2] : vector<1x256x1xf32> to vector<1xf32>
      %55 = vector.shape_cast %54 : vector<1xf32> to vector<1x1x1xf32>
      %56 = vector.extract %55[0, 0, 0] : f32 from vector<1x1x1xf32>
      %57 = tpu.iota {dimensions = array<i32: 2>} : vector<1x1x128xi32>
      %c0_i32_29 = arith.constant 0 : i32
      %58 = vector.broadcast %c0_i32_29 : i32 to vector<1x1x128xi32>
      %59 = arith.cmpi eq, %57, %58 : vector<1x1x128xi32>
      %cst_30 = arith.constant 0.000000e+00 : f32
      %60 = vector.broadcast %56 : f32 to vector<1x1x128xf32>
      %61 = vector.broadcast %cst_30 : f32 to vector<1x1x128xf32>
      %62 = arith.select %59, %60, %61 : vector<1x1x128xi1>, vector<1x1x128xf32>
      %c0_31 = arith.constant 0 : index
      %c0_32 = arith.constant 0 : index
      %c0_33 = arith.constant 0 : index
      %63 = vector.load %arg5[%c0_31, %c0_32, %c0_33] : memref<1x1x128xf32, #tpu.memory_space<vmem>>, vector<1x1x128xf32>
      tpu.vector_store %arg5[%c0_31, %c0_32, %c0_33], %62 {strides = array<i32>} : memref<1x1x128xf32, #tpu.memory_space<vmem>>, vector<1x1x128xf32>,
    } else {
    }
    return
  }
  func.func @transform_0(%arg0: i32, %arg1: i32) -> (i32, i32) {
    %c0_i32 = arith.constant 0 : i32
    %c0_i32_0 = arith.constant 0 : i32
    return %arg0, %c0_i32 : i32, i32
  }
  func.func @transform_1(%arg0: i32, %arg1: i32) -> (i32, i32) {
    %c0_i32 = arith.constant 0 : i32
    %c0_i32_0 = arith.constant 0 : i32
    return %c0_i32, %arg1 : i32, i32
  }
  func.func @transform_2(%arg0: i32, %arg1: i32) -> (i32, i32) {
    %c0_i32 = arith.constant 0 : i32
    %c0_i32_0 = arith.constant 0 : i32
    return %c0_i32, %arg1 : i32, i32
  }
  func.func @transform_3(%arg0: i32, %arg1: i32) -> (i32, i32, i32) {
    %c0_i32 = arith.constant 0 : i32
    %c0_i32_0 = arith.constant 0 : i32
    %c0_i32_1 = arith.constant 0 : i32
    return %arg0, %c0_i32, %c0_i32_0 : i32, i32, i32
  }
}

</mosaic_0001>

<llo_original>
// kernel: tpu_custom_call.1
$region0: #{tpu_custom_call.1}
  #allocation0 [shape = 'u32[]', space=smem, size = 0x4, offset = 0x4, fixed_abs, tag = 'smem constant byte address 0x4 - core index']
  #allocation1 [shape = 'u32[144,128]{1,0:T(1,128)}', space=vmem, size = 0x12000, scoped, tag = 'internal scratch']
  #allocation2 [shape = 'f32[256,1]{1,0:T(8,128)}', space=vmem, size = 0x20000, scoped, tag = 'scratch operand']
  #allocation3 [shape = 'f32[256,1]{1,0:T(8,128)}', space=vmem, size = 0x20000, scoped, tag = 'scratch operand']
  %s0 = inlined_call_operand.vmem [shape: bf16[256,32], index: 0, kind: input, shape index: {}]
  %s1 = inlined_call_operand.vmem [shape: bf16[32,256], index: 1, kind: input, shape index: {}]
  %s2 = inlined_call_operand.vmem [shape: f32[8,256], index: 2, kind: input, shape index: {}]
  %s3 = inlined_call_operand.hbm [shape: f32[1,1,128], index: 3, kind: output, shape index: {}]
  %s4 = sld [smem:[#allocation0]]
  $region30: #{tpu_custom_call.1} parent=0
    _
  %s6 = ssub.s32 1, %s4
  %s7 = scalar_select 0, %s6, %s4
  $region1: #{tpu_custom_call.1} parent=0
    #allocation4 [shape = 'u8[512]{0}', space=vmem, size = 0x400, scoped, tag = 'output window, operand 0, single buffered']
    #allocation5 [shape = 's32[1]{0}', space=sflag, size = 0x4, scoped, tag = 'scoped memory for tpu_custom_call.1']
    %8 = vsyncpa [#allocation5], 0
    // Predicated region
    $region2: #{tpu_custom_call.1} parent=1 // pred_check
      _
    $region3: #{tpu_custom_call.1} parent=1 // pred_check_branch
      %10 = sbr.rel (0) target = $region5
    $region4: #{tpu_custom_call.1} parent=1 // pred_region
      _
    $region5: #{tpu_custom_call.1} parent=1 // pred_fallthru
      _
    // Predicated region
    $region6: #{tpu_custom_call.1} parent=1 // pred_check
      _
    $region7: #{tpu_custom_call.1} parent=1 // pred_check_branch
      %12 = sbr.rel (0) target = $region9
    $region8: #{tpu_custom_call.1} parent=1 // pred_region
      _
    $region9: #{tpu_custom_call.1} parent=1 // pred_fallthru
      _
    // Predicated region
    $region10: #{tpu_custom_call.1} parent=1 // pred_check
      _
    $region11: #{tpu_custom_call.1} parent=1 // pred_check_branch
      %14 = sbr.rel (0) target = $region13
    $region12: #{tpu_custom_call.1} parent=1 // pred_region
      _
    $region13: #{tpu_custom_call.1} parent=1 // pred_fallthru
      _
    %s16 = smul.u32 0, 256
    %p17 = scmp.eq.s32.totalorder 0, 0
    // Predicated region
    $region14: #{tpu_custom_call.1} parent=1 // pred_check
      %p18 = pneg %p17
    $region15: #{tpu_custom_call.1} parent=1 // pred_check_branch
      %20 = sbr.rel (%p18) target = $region17
    $region16: #{tpu_custom_call.1} parent=1 // pred_region
      %vm21 = vcmask 7168
      %22 = vst.msk [vmem:[#allocation2] sm:$0xff] %vm21, -inf
      %23 = vst.msk [vmem:[#allocation2 + $0x8] sm:$0xff] %vm21, -inf
      %24 = vst.msk [vmem:[#allocation2 + $0x10] sm:$0xff] %vm21, -inf
      %25 = vst.msk [vmem:[#allocation2 + $0x18] sm:$0xff] %vm21, -inf
      %26 = vst.msk [vmem:[#allocation2 + $0x20] sm:$0xff] %vm21, -inf
      %27 = vst.msk [vmem:[#allocation2 + $0x28] sm:$0xff] %vm21, -inf
      %28 = vst.msk [vmem:[#allocation2 + $0x30] sm:$0xff] %vm21, -inf
      %29 = vst.msk [vmem:[#allocation2 + $0x38] sm:$0xff] %vm21, -inf
      %30 = vst.msk [vmem:[#allocation2 + $0x40] sm:$0xff] %vm21, -inf
      %31 = vst.msk [vmem:[#allocation2 + $0x48] sm:$0xff] %vm21, -inf
      %32 = vst.msk [vmem:[#allocation2 + $0x50] sm:$0xff] %vm21, -inf
      %33 = vst.msk [vmem:[#allocation2 + $0x58] sm:$0xff] %vm21, -inf
      %34 = vst.msk [vmem:[#allocation2 + $0x60] sm:$0xff] %vm21, -inf
      %35 = vst.msk [vmem:[#allocation2 + $0x68] sm:$0xff] %vm21, -inf
      %36 = vst.msk [vmem:[#allocation2 + $0x70] sm:$0xff] %vm21, -inf
      %37 = vst.msk [vmem:[#allocation2 + $0x78] sm:$0xff] %vm21, -inf
      %38 = vst.msk [vmem:[#allocation2 + $0x80] sm:$0xff] %vm21, -inf
      %39 = vst.msk [vmem:[#allocation2 + $0x88] sm:$0xff] %vm21, -inf
      %40 = vst.msk [vmem:[#allocation2 + $0x90] sm:$0xff] %vm21, -inf
      %41 = vst.msk [vmem:[#allocation2 + $0x98] sm:$0xff] %vm21, -inf
      %42 = vst.msk [vmem:[#allocation2 + $0xa0] sm:$0xff] %vm21, -inf
      %43 = vst.msk [vmem:[#allocation2 + $0xa8] sm:$0xff] %vm21, -inf
      %44 = vst.msk [vmem:[#allocation2 + $0xb0] sm:$0xff] %vm21, -inf
      %45 = vst.msk [vmem:[#allocation2 + $0xb8] sm:$0xff] %vm21, -inf
      %46 = vst.msk [vmem:[#allocation2 + $0xc0] sm:$0xff] %vm21, -inf
      %47 = vst.msk [vmem:[#allocation2 + $0xc8] sm:$0xff] %vm21, -inf
      %48 = vst.msk [vmem:[#allocation2 + $0xd0] sm:$0xff] %vm21, -inf
      %49 = vst.msk [vmem:[#allocation2 + $0xd8] sm:$0xff] %vm21, -inf
      %50 = vst.msk [vmem:[#allocation2 + $0xe0] sm:$0xff] %vm21, -inf
      %51 = vst.msk [vmem:[#allocation2 + $0xe8] sm:$0xff] %vm21, -inf
      %52 = vst.msk [vmem:[#allocation2 + $0xf0] sm:$0xff] %vm21, -inf
      %53 = vst.msk [vmem:[#allocation2 + $0xf8] sm:$0xff] %vm21, -inf
      %54 = vst.msk [vmem:[#allocation3] sm:$0xff] %vm21, 0.0
      %55 = vst.msk [vmem:[#allocation3 + $0x8] sm:$0xff] %vm21, 0.0
      %56 = vst.msk [vmem:[#allocation3 + $0x10] sm:$0xff] %vm21, 0.0
      %57 = vst.msk [vmem:[#allocation3 + $0x18] sm:$0xff] %vm21, 0.0
      %58 = vst.msk [vmem:[#allocation3 + $0x20] sm:$0xff] %vm21, 0.0
      %59 = vst.msk [vmem:[#allocation3 + $0x28] sm:$0xff] %vm21, 0.0
      %60 = vst.msk [vmem:[#allocation3 + $0x30] sm:$0xff] %vm21, 0.0
      %61 = vst.msk [vmem:[#allocation3 + $0x38] sm:$0xff] %vm21, 0.0
      %62 = vst.msk [vmem:[#allocation3 + $0x40] sm:$0xff] %vm21, 0.0
      %63 = vst.msk [vmem:[#allocation3 + $0x48] sm:$0xff] %vm21, 0.0
      %64 = vst.msk [vmem:[#allocation3 + $0x50] sm:$0xff] %vm21, 0.0
      %65 = vst.msk [vmem:[#allocation3 + $0x58] sm:$0xff] %vm21, 0.0
      %66 = vst.msk [vmem:[#allocation3 + $0x60] sm:$0xff] %vm21, 0.0
      %67 = vst.msk [vmem:[#allocation3 + $0x68] sm:$0xff] %vm21, 0.0
      %68 = vst.msk [vmem:[#allocation3 + $0x70] sm:$0xff] %vm21, 0.0
      %69 = vst.msk [vmem:[#allocation3 + $0x78] sm:$0xff] %vm21, 0.0
      %70 = vst.msk [vmem:[#allocation3 + $0x80] sm:$0xff] %vm21, 0.0
      %71 = vst.msk [vmem:[#allocation3 + $0x88] sm:$0xff] %vm21, 0.0
      %72 = vst.msk [vmem:[#allocation3 + $0x90] sm:$0xff] %vm21, 0.0
      %73 = vst.msk [vmem:[#allocation3 + $0x98] sm:$0xff] %vm21, 0.0
      %74 = vst.msk [vmem:[#allocation3 + $0xa0] sm:$0xff] %vm21, 0.0
      %75 = vst.msk [vmem:[#allocation3 + $0xa8] sm:$0xff] %vm21, 0.0
      %76 = vst.msk [vmem:[#allocation3 + $0xb0] sm:$0xff] %vm21, 0.0
      %77 = vst.msk [vmem:[#allocation3 + $0xb8] sm:$0xff] %vm21, 0.0
      %78 = vst.msk [vmem:[#allocation3 + $0xc0] sm:$0xff] %vm21, 0.0
      %79 = vst.msk [vmem:[#allocation3 + $0xc8] sm:$0xff] %vm21, 0.0
      %80 = vst.msk [vmem:[#allocation3 + $0xd0] sm:$0xff] %vm21, 0.0
      %81 = vst.msk [vmem:[#allocation3 + $0xd8] sm:$0xff] %vm21, 0.0
      %82 = vst.msk [vmem:[#allocation3 + $0xe0] sm:$0xff] %vm21, 0.0
      %83 = vst.msk [vmem:[#allocation3 + $0xe8] sm:$0xff] %vm21, 0.0
      %84 = vst.msk [vmem:[#allocation3 + $0xf0] sm:$0xff] %vm21, 0.0
      %85 = vst.msk [vmem:[#allocation3 + $0xf8] sm:$0xff] %vm21, 0.0
    $region17: #{tpu_custom_call.1} parent=1 // pred_fallthru
      _
    %v86 = vld [vmem:[%s0] sm:$0xf]
    %v87 = vld [vmem:[%s0 + $0x4] sm:$0xf]
    %v88 = vld [vmem:[%s0 + $0x8] sm:$0xf]
    %v89 = vld [vmem:[%s0 + $0xc] sm:$0xf]
    %v90 = vld [vmem:[%s0 + $0x10] sm:$0xf]
    %v91 = vld [vmem:[%s0 + $0x14] sm:$0xf]
    %v92 = vld [vmem:[%s0 + $0x18] sm:$0xf]
    %v93 = vld [vmem:[%s0 + $0x1c] sm:$0xf]
    %v94 = vld [vmem:[%s0 + $0x20] sm:$0xf]
    %v95 = vld [vmem:[%s0 + $0x24] sm:$0xf]
    %v96 = vld [vmem:[%s0 + $0x28] sm:$0xf]
    %v97 = vld [vmem:[%s0 + $0x2c] sm:$0xf]
    %v98 = vld [vmem:[%s0 + $0x30] sm:$0xf]
    %v99 = vld [vmem:[%s0 + $0x34] sm:$0xf]
    %v100 = vld [vmem:[%s0 + $0x38] sm:$0xf]
    %v101 = vld [vmem:[%s0 + $0x3c] sm:$0xf]
    %v102 = vld [vmem:[%s0 + $0x40] sm:$0xf]
    %v103 = vld [vmem:[%s0 + $0x44] sm:$0xf]
    %v104 = vld [vmem:[%s0 + $0x48] sm:$0xf]
    %v105 = vld [vmem:[%s0 + $0x4c] sm:$0xf]
    %v106 = vld [vmem:[%s0 + $0x50] sm:$0xf]
    %v107 = vld [vmem:[%s0 + $0x54] sm:$0xf]
    %v108 = vld [vmem:[%s0 + $0x58] sm:$0xf]
    %v109 = vld [vmem:[%s0 + $0x5c] sm:$0xf]
    %v110 = vld [vmem:[%s0 + $0x60] sm:$0xf]
    %v111 = vld [vmem:[%s0 + $0x64] sm:$0xf]
    %v112 = vld [vmem:[%s0 + $0x68] sm:$0xf]
    %v113 = vld [vmem:[%s0 + $0x6c] sm:$0xf]
    %v114 = vld [vmem:[%s0 + $0x70] sm:$0xf]
    %v115 = vld [vmem:[%s0 + $0x74] sm:$0xf]
    %v116 = vld [vmem:[%s0 + $0x78] sm:$0xf]
    %v117 = vld [vmem:[%s0 + $0x7c] sm:$0xf]
    %v118 = vld [vmem:[%s1] sm:$0xff]
    %v119 = vld [vmem:[%s1 + $0x8] sm:$0xff]
    %v120 = vld [vmem:[%s1 + $0x10] sm:$0xff]
    %v121 = vld [vmem:[%s1 + $0x18] sm:$0xff]
    %v154 = vunpack.c.l.b16 %v86
    %v155 = vunpack.c.l.b16 %v87
    %v156 = vunpack.c.l.b16 %v88
    %v157 = vunpack.c.l.b16 %v89
    %v158 = vunpack.c.l.b16 %v90
    %v159 = vunpack.c.l.b16 %v91
    %v160 = vunpack.c.l.b16 %v92
    %v161 = vunpack.c.l.b16 %v93
    %v162 = vunpack.c.l.b16 %v94
    %v163 = vunpack.c.l.b16 %v95
    %v164 = vunpack.c.l.b16 %v96
    %v165 = vunpack.c.l.b16 %v97
    %v166 = vunpack.c.l.b16 %v98
    %v167 = vunpack.c.l.b16 %v99
    %v168 = vunpack.c.l.b16 %v100
    %v169 = vunpack.c.l.b16 %v101
    %v170 = vunpack.c.l.b16 %v102
    %v171 = vunpack.c.l.b16 %v103
    %v172 = vunpack.c.l.b16 %v104
    %v173 = vunpack.c.l.b16 %v105
    %v174 = vunpack.c.l.b16 %v106
    %v175 = vunpack.c.l.b16 %v107
    %v176 = vunpack.c.l.b16 %v108
    %v177 = vunpack.c.l.b16 %v109
    %v178 = vunpack.c.l.b16 %v110
    %v179 = vunpack.c.l.b16 %v111
    %v180 = vunpack.c.l.b16 %v112
    %v181 = vunpack.c.l.b16 %v113
    %v182 = vunpack.c.l.b16 %v114
    %v183 = vunpack.c.l.b16 %v115
    %v184 = vunpack.c.l.b16 %v116
    %v185 = vunpack.c.l.b16 %v117
    %v186 = vpack.c.b16 %v155, %v154
    %v187 = vpack.c.b16 %v157, %v156
    %v188 = vpack.c.b16 %v159, %v158
    %v189 = vpack.c.b16 %v161, %v160
    %v190 = vpack.c.b16 %v163, %v162
    %v191 = vpack.c.b16 %v165, %v164
    %v192 = vpack.c.b16 %v167, %v166
    %v193 = vpack.c.b16 %v169, %v168
    %v194 = vpack.c.b16 %v171, %v170
    %v195 = vpack.c.b16 %v173, %v172
    %v196 = vpack.c.b16 %v175, %v174
    %v197 = vpack.c.b16 %v177, %v176
    %v198 = vpack.c.b16 %v179, %v178
    %v199 = vpack.c.b16 %v181, %v180
    %v200 = vpack.c.b16 %v183, %v182
    %v201 = vpack.c.b16 %v185, %v184
    %v206 = vunpack.c.l.b16 %v118
    %v207 = vunpack.c.h.b16 %v118
    %v208 = vunpack.c.l.b16 %v119
    %v209 = vunpack.c.h.b16 %v119
    %v210 = vunpack.c.l.b16 %v120
    %v211 = vunpack.c.h.b16 %v120
    %v212 = vunpack.c.l.b16 %v121
    %v213 = vunpack.c.h.b16 %v121
    %v214 = vpack.c.b16 %v208, %v206
    %v215 = vpack.c.b16 %v209, %v207
    %v216 = vpack.c.b16 %v212, %v210
    %v217 = vpack.c.b16 %v213, %v211
    %vm222 = vcmask 261120
    %v224 = vsel %vm222, %v186, 0
    %v227 = vsel %vm222, %v187, 0
    %v230 = vsel %vm222, %v188, 0
    %v233 = vsel %vm222, %v189, 0
    %v236 = vsel %vm222, %v190, 0
    %v239 = vsel %vm222, %v191, 0
    %v242 = vsel %vm222, %v192, 0
    %v245 = vsel %vm222, %v193, 0
    %v248 = vsel %vm222, %v194, 0
    %v251 = vsel %vm222, %v195, 0
    %v254 = vsel %vm222, %v196, 0
    %v257 = vsel %vm222, %v197, 0
    %v260 = vsel %vm222, %v198, 0
    %v263 = vsel %vm222, %v199, 0
    %v266 = vsel %vm222, %v200, 0
    %v269 = vsel %vm222, %v201, 0
    %271 = vmatprep.subr.bf16.mxu0 %v215
    %272 = vmatpush1.bf16.msra.mxu0 %v214
    %273 = vmatprep.subr.bf16.mxu0 %v217
    %274 = vmatpush1.bf16.msra.mxu0 %v216
    %275 = vmatprep.subr.bf16.mxu0 0
    %276 = vmatpush1.bf16.msra.mxu0 0
    %277 = vmatprep.subr.bf16.mxu0 0
    %278 = vmatpush1.bf16.msra.mxu0 0
    %279 = vmatprep.subr.bf16.mxu0 0
    %280 = vmatpush1.bf16.msra.mxu0 0
    %281 = vmatprep.subr.bf16.mxu0 0
    %282 = vmatpush1.bf16.msra.mxu0 0
    %283 = vmatprep.subr.bf16.mxu0 0
    %284 = vmatpush1.bf16.msra.mxu0 0
    %285 = vmatprep.subr.bf16.mxu0 0
    %286 = vmatpush1.bf16.msra.mxu0 0
    %287 = vmatprep.subr.bf16.mxu0 0
    %288 = vmatpush1.bf16.msra.mxu0 0
    %289 = vmatprep.subr.bf16.mxu0 0
    %290 = vmatpush1.bf16.msra.mxu0 0
    %291 = vmatprep.subr.bf16.mxu0 0
    %292 = vmatpush1.bf16.msra.mxu0 0
    %293 = vmatprep.subr.bf16.mxu0 0
    %294 = vmatpush1.bf16.msra.mxu0 0
    %295 = vmatprep.subr.bf16.mxu0 0
    %296 = vmatpush1.bf16.msra.mxu0 0
    %297 = vmatprep.subr.bf16.mxu0 0
    %298 = vmatpush1.bf16.msra.mxu0 0
    %299 = vmatprep.subr.bf16.mxu0 0
    %300 = vmatpush1.bf16.msra.mxu0 0
    %301 = vmatprep.subr.bf16.mxu0 0
    %302 = vmatpush1.bf16.msra.mxu0 0
    %303 = vmatprep.mubr.bf16.mxu0 0
    %304 = vmatmul.mubr.bf16.gmra.mrb[0].mxu0 %v224
    %v305 = vpop.f32.mrb[0].mxu0
    %v306 = vadd.f32 0.0, %v305
    %v307 = vpop.f32.mrb[0].mxu0
    %v308 = vadd.f32 0.0, %v307
    %v309 = vpop.f32.mrb[0].mxu0
    %v310 = vadd.f32 0.0, %v309
    %v311 = vpop.f32.mrb[0].mxu0
    %v312 = vadd.f32 0.0, %v311
    %313 = vmatprep.mubr.bf16.mxu0 0
    %314 = vmatmul.mubr.bf16.gmra.mrb[0].mxu0 %v227
    %v315 = vpop.f32.mrb[0].mxu0
    %v316 = vadd.f32 0.0, %v315
    %v317 = vpop.f32.mrb[0].mxu0
    %v318 = vadd.f32 0.0, %v317
    %v319 = vpop.f32.mrb[0].mxu0
    %v320 = vadd.f32 0.0, %v319
    %v321 = vpop.f32.mrb[0].mxu0
    %v322 = vadd.f32 0.0, %v321
    %323 = vmatprep.mubr.bf16.mxu0 0
    %324 = vmatmul.mubr.bf16.gmra.mrb[0].mxu0 %v230
    %v325 = vpop.f32.mrb[0].mxu0
    %v326 = vadd.f32 0.0, %v325
    %v327 = vpop.f32.mrb[0].mxu0
    %v328 = vadd.f32 0.0, %v327
    %v329 = vpop.f32.mrb[0].mxu0
    %v330 = vadd.f32 0.0, %v329
    %v331 = vpop.f32.mrb[0].mxu0
    %v332 = vadd.f32 0.0, %v331
    %333 = vmatprep.mubr.bf16.mxu0 0
    %334 = vmatmul.mubr.bf16.gmra.mrb[0].mxu0 %v233
    %v335 = vpop.f32.mrb[0].mxu0
    %v336 = vadd.f32 0.0, %v335
    %v337 = vpop.f32.mrb[0].mxu0
    %v338 = vadd.f32 0.0, %v337
    %v339 = vpop.f32.mrb[0].mxu0
    %v340 = vadd.f32 0.0, %v339
    %v341 = vpop.f32.mrb[0].mxu0
    %v342 = vadd.f32 0.0, %v341
    %343 = vmatprep.mubr.bf16.mxu0 0
    %344 = vmatmul.mubr.bf16.gmra.mrb[0].mxu0 %v236
    %v345 = vpop.f32.mrb[0].mxu0
    %v346 = vadd.f32 0.0, %v345
    %v347 = vpop.f32.mrb[0].mxu0
    %v348 = vadd.f32 0.0, %v347
    %v349 = vpop.f32.mrb[0].mxu0
    %v350 = vadd.f32 0.0, %v349
    %v351 = vpop.f32.mrb[0].mxu0
    %v352 = vadd.f32 0.0, %v351
    %353 = vmatprep.mubr.bf16.mxu0 0
    %354 = vmatmul.mubr.bf16.gmra.mrb[0].mxu0 %v239
    %v355 = vpop.f32.mrb[0].mxu0
    %v356 = vadd.f32 0.0, %v355
    %v357 = vpop.f32.mrb[0].mxu0
    %v358 = vadd.f32 0.0, %v357
    %v359 = vpop.f32.mrb[0].mxu0
    %v360 = vadd.f32 0.0, %v359
    %v361 = vpop.f32.mrb[0].mxu0
    %v362 = vadd.f32 0.0, %v361
    %363 = vmatprep.mubr.bf16.mxu0 0
    %364 = vmatmul.mubr.bf16.gmra.mrb[0].mxu0 %v242
    %v365 = vpop.f32.mrb[0].mxu0
    %v366 = vadd.f32 0.0, %v365
    %v367 = vpop.f32.mrb[0].mxu0
    %v368 = vadd.f32 0.0, %v367
    %v369 = vpop.f32.mrb[0].mxu0
    %v370 = vadd.f32 0.0, %v369
    %v371 = vpop.f32.mrb[0].mxu0
    %v372 = vadd.f32 0.0, %v371
    %373 = vmatprep.mubr.bf16.mxu0 0
    %374 = vmatmul.mubr.bf16.gmra.mrb[0].mxu0 %v245
    %v375 = vpop.f32.mrb[0].mxu0
    %v376 = vadd.f32 0.0, %v375
    %v377 = vpop.f32.mrb[0].mxu0
    %v378 = vadd.f32 0.0, %v377
    %v379 = vpop.f32.mrb[0].mxu0
    %v380 = vadd.f32 0.0, %v379
    %v381 = vpop.f32.mrb[0].mxu0
    %v382 = vadd.f32 0.0, %v381
    %383 = vmatprep.mubr.bf16.mxu0 0
    %384 = vmatmul.mubr.bf16.gmra.mrb[0].mxu0 %v248
    %v385 = vpop.f32.mrb[0].mxu0
    %v386 = vadd.f32 0.0, %v385
    %v387 = vpop.f32.mrb[0].mxu0
    %v388 = vadd.f32 0.0, %v387
    %v389 = vpop.f32.mrb[0].mxu0
    %v390 = vadd.f32 0.0, %v389
    %v391 = vpop.f32.mrb[0].mxu0
    %v392 = vadd.f32 0.0, %v391
    %393 = vmatprep.mubr.bf16.mxu0 0
    %394 = vmatmul.mubr.bf16.gmra.mrb[0].mxu0 %v251
    %v395 = vpop.f32.mrb[0].mxu0
    %v396 = vadd.f32 0.0, %v395
    %v397 = vpop.f32.mrb[0].mxu0
    %v398 = vadd.f32 0.0, %v397
    %v399 = vpop.f32.mrb[0].mxu0
    %v400 = vadd.f32 0.0, %v399
    %v401 = vpop.f32.mrb[0].mxu0
    %v402 = vadd.f32 0.0, %v401
    %403 = vmatprep.mubr.bf16.mxu0 0
    %404 = vmatmul.mubr.bf16.gmra.mrb[0].mxu0 %v254
    %v405 = vpop.f32.mrb[0].mxu0
    %v406 = vadd.f32 0.0, %v405
    %v407 = vpop.f32.mrb[0].mxu0
    %v408 = vadd.f32 0.0, %v407
    %v409 = vpop.f32.mrb[0].mxu0
    %v410 = vadd.f32 0.0, %v409
    %v411 = vpop.f32.mrb[0].mxu0
    %v412 = vadd.f32 0.0, %v411
    %413 = vmatprep.mubr.bf16.mxu0 0
    %414 = vmatmul.mubr.bf16.gmra.mrb[0].mxu0 %v257
    %v415 = vpop.f32.mrb[0].mxu0
    %v416 = vadd.f32 0.0, %v415
    %v417 = vpop.f32.mrb[0].mxu0
    %v418 = vadd.f32 0.0, %v417
    %v419 = vpop.f32.mrb[0].mxu0
    %v420 = vadd.f32 0.0, %v419
    %v421 = vpop.f32.mrb[0].mxu0
    %v422 = vadd.f32 0.0, %v421
    %423 = vmatprep.mubr.bf16.mxu0 0
    %424 = vmatmul.mubr.bf16.gmra.mrb[0].mxu0 %v260
    %v425 = vpop.f32.mrb[0].mxu0
    %v426 = vadd.f32 0.0, %v425
    %v427 = vpop.f32.mrb[0].mxu0
    %v428 = vadd.f32 0.0, %v427
    %v429 = vpop.f32.mrb[0].mxu0
    %v430 = vadd.f32 0.0, %v429
    %v431 = vpop.f32.mrb[0].mxu0
    %v432 = vadd.f32 0.0, %v431
    %433 = vmatprep.mubr.bf16.mxu0 0
    %434 = vmatmul.mubr.bf16.gmra.mrb[0].mxu0 %v263
    %v435 = vpop.f32.mrb[0].mxu0
    %v436 = vadd.f32 0.0, %v435
    %v437 = vpop.f32.mrb[0].mxu0
    %v438 = vadd.f32 0.0, %v437
    %v439 = vpop.f32.mrb[0].mxu0
    %v440 = vadd.f32 0.0, %v439
    %v441 = vpop.f32.mrb[0].mxu0
    %v442 = vadd.f32 0.0, %v441
    %443 = vmatprep.mubr.bf16.mxu0 0
    %444 = vmatmul.mubr.bf16.gmra.mrb[0].mxu0 %v266
    %v445 = vpop.f32.mrb[0].mxu0
    %v446 = vadd.f32 0.0, %v445
    %v447 = vpop.f32.mrb[0].mxu0
    %v448 = vadd.f32 0.0, %v447
    %v449 = vpop.f32.mrb[0].mxu0
    %v450 = vadd.f32 0.0, %v449
    %v451 = vpop.f32.mrb[0].mxu0
    %v452 = vadd.f32 0.0, %v451
    %453 = vmatprep.mubr.bf16.mxu0 0
    %454 = vmatmul.mubr.bf16.gmra.mrb[0].mxu0 %v269
    %v455 = vpop.f32.mrb[0].mxu0
    %v456 = vadd.f32 0.0, %v455
    %v457 = vpop.f32.mrb[0].mxu0
    %v458 = vadd.f32 0.0, %v457
    %v459 = vpop.f32.mrb[0].mxu0
    %v460 = vadd.f32 0.0, %v459
    %v461 = vpop.f32.mrb[0].mxu0
    %v462 = vadd.f32 0.0, %v461
    %463 = vdwg.mxu0
    %v464 = vld [vmem:[%s2] sm:$0xff]
    %v465 = vld [vmem:[%s2 + $0x8] sm:$0xff]
    %v466 = vlaneseq
    %v467 = vshrl.u32 %v466, 7
    %v468 = vsub.s32 0, %v467
    %v469 = vrot.slane %v464, %v468
    %v470 = vlaneseq
    %v471 = vshrl.u32 %v470, 7
    %v472 = vsub.s32 0, %v471
    %v473 = vrot.slane %v465, %v472
    %v474 = vmul.f32 %v306, %v469
    %v475 = vmul.f32 %v308, %v473
    %v476 = vmul.f32 %v310, %v469
    %v477 = vmul.f32 %v312, %v473
    %v478 = vmul.f32 %v316, %v469
    %v479 = vmul.f32 %v318, %v473
    %v480 = vmul.f32 %v320, %v469
    %v481 = vmul.f32 %v322, %v473
    %v482 = vmul.f32 %v326, %v469
    %v483 = vmul.f32 %v328, %v473
    %v484 = vmul.f32 %v330, %v469
    %v485 = vmul.f32 %v332, %v473
    %v486 = vmul.f32 %v336, %v469
    %v487 = vmul.f32 %v338, %v473
    %v488 = vmul.f32 %v340, %v469
    %v489 = vmul.f32 %v342, %v473
    %v490 = vmul.f32 %v346, %v469
    %v491 = vmul.f32 %v348, %v473
    %v492 = vmul.f32 %v350, %v469
    %v493 = vmul.f32 %v352, %v473
    %v494 = vmul.f32 %v356, %v469
    %v495 = vmul.f32 %v358, %v473
    %v496 = vmul.f32 %v360, %v469
    %v497 = vmul.f32 %v362, %v473
    %v498 = vmul.f32 %v366, %v469
    %v499 = vmul.f32 %v368, %v473
    %v500 = vmul.f32 %v370, %v469
    %v501 = vmul.f32 %v372, %v473
    %v502 = vmul.f32 %v376, %v469
    %v503 = vmul.f32 %v378, %v473
    %v504 = vmul.f32 %v380, %v469
    %v505 = vmul.f32 %v382, %v473
    %v506 = vmul.f32 %v386, %v469
    %v507 = vmul.f32 %v388, %v473
    %v508 = vmul.f32 %v390, %v469
    %v509 = vmul.f32 %v392, %v473
    %v510 = vmul.f32 %v396, %v469
    %v511 = vmul.f32 %v398, %v473
    %v512 = vmul.f32 %v400, %v469
    %v513 = vmul.f32 %v402, %v473
    %v514 = vmul.f32 %v406, %v469
    %v515 = vmul.f32 %v408, %v473
    %v516 = vmul.f32 %v410, %v469
    %v517 = vmul.f32 %v412, %v473
    %v518 = vmul.f32 %v416, %v469
    %v519 = vmul.f32 %v418, %v473
    %v520 = vmul.f32 %v420, %v469
    %v521 = vmul.f32 %v422, %v473
    %v522 = vmul.f32 %v426, %v469
    %v523 = vmul.f32 %v428, %v473
    %v524 = vmul.f32 %v430, %v469
    %v525 = vmul.f32 %v432, %v473
    %v526 = vmul.f32 %v436, %v469
    %v527 = vmul.f32 %v438, %v473
    %v528 = vmul.f32 %v440, %v469
    %v529 = vmul.f32 %v442, %v473
    %v530 = vmul.f32 %v446, %v469
    %v531 = vmul.f32 %v448, %v473
    %v532 = vmul.f32 %v450, %v469
    %v533 = vmul.f32 %v452, %v473
    %v534 = vmul.f32 %v456, %v469
    %v535 = vmul.f32 %v458, %v473
    %v536 = vmul.f32 %v460, %v469
    %v537 = vmul.f32 %v462, %v473
    %v538 = vlaneseq
    %v539 = vshrl.u32 %v538, 7
    %v540 = vsub.s32 1, %v539
    %v541 = vrot.slane %v464, %v540
    %v542 = vlaneseq
    %v543 = vshrl.u32 %v542, 7
    %v544 = vsub.s32 1, %v543
    %v545 = vrot.slane %v465, %v544
    %v546 = vadd.f32 %v474, %v541
    %v547 = vadd.f32 %v475, %v545
    %v548 = vadd.f32 %v476, %v541
    %v549 = vadd.f32 %v477, %v545
    %v550 = vadd.f32 %v478, %v541
    %v551 = vadd.f32 %v479, %v545
    %v552 = vadd.f32 %v480, %v541
    %v553 = vadd.f32 %v481, %v545
    %v554 = vadd.f32 %v482, %v541
    %v555 = vadd.f32 %v483, %v545
    %v556 = vadd.f32 %v484, %v541
    %v557 = vadd.f32 %v485, %v545
    %v558 = vadd.f32 %v486, %v541
    %v559 = vadd.f32 %v487, %v545
    %v560 = vadd.f32 %v488, %v541
    %v561 = vadd.f32 %v489, %v545
    %v562 = vadd.f32 %v490, %v541
    %v563 = vadd.f32 %v491, %v545
    %v564 = vadd.f32 %v492, %v541
    %v565 = vadd.f32 %v493, %v545
    %v566 = vadd.f32 %v494, %v541
    %v567 = vadd.f32 %v495, %v545
    %v568 = vadd.f32 %v496, %v541
    %v569 = vadd.f32 %v497, %v545
    %v570 = vadd.f32 %v498, %v541
    %v571 = vadd.f32 %v499, %v545
    %v572 = vadd.f32 %v500, %v541
    %v573 = vadd.f32 %v501, %v545
    %v574 = vadd.f32 %v502, %v541
    %v575 = vadd.f32 %v503, %v545
    %v576 = vadd.f32 %v504, %v541
    %v577 = vadd.f32 %v505, %v545
    %v578 = vadd.f32 %v506, %v541
    %v579 = vadd.f32 %v507, %v545
    %v580 = vadd.f32 %v508, %v541
    %v581 = vadd.f32 %v509, %v545
    %v582 = vadd.f32 %v510, %v541
    %v583 = vadd.f32 %v511, %v545
    %v584 = vadd.f32 %v512, %v541
    %v585 = vadd.f32 %v513, %v545
    %v586 = vadd.f32 %v514, %v541
    %v587 = vadd.f32 %v515, %v545
    %v588 = vadd.f32 %v516, %v541
    %v589 = vadd.f32 %v517, %v545
    %v590 = vadd.f32 %v518, %v541
    %v591 = vadd.f32 %v519, %v545
    %v592 = vadd.f32 %v520, %v541
    %v593 = vadd.f32 %v521, %v545
    %v594 = vadd.f32 %v522, %v541
    %v595 = vadd.f32 %v523, %v545
    %v596 = vadd.f32 %v524, %v541
    %v597 = vadd.f32 %v525, %v545
    %v598 = vadd.f32 %v526, %v541
    %v599 = vadd.f32 %v527, %v545
    %v600 = vadd.f32 %v528, %v541
    %v601 = vadd.f32 %v529, %v545
    %v602 = vadd.f32 %v530, %v541
    %v603 = vadd.f32 %v531, %v545
    %v604 = vadd.f32 %v532, %v541
    %v605 = vadd.f32 %v533, %v545
    %v606 = vadd.f32 %v534, %v541
    %v607 = vadd.f32 %v535, %v545
    %v608 = vadd.f32 %v536, %v541
    %v609 = vadd.f32 %v537, %v545
    %v610 = vlaneseq
    %v611 = vand.u32 %v610, 127
    %v612 = vadd.s32 %v611, 128
    %v613 = vmax.f32 %v546, %v547
    %614 = vmax.xlane.f32.xlu0 %v613
    %v615 = vpop.xlane.xlu0 %614
    %v616 = vmax.f32 %v548, %v549
    %617 = vmax.xlane.f32.xlu0 %v616
    %v618 = vpop.xlane.xlu0 %617
    %v619 = vmax.f32 %v550, %v551
    %620 = vmax.xlane.f32.xlu0 %v619
    %v621 = vpop.xlane.xlu0 %620
    %v622 = vmax.f32 %v552, %v553
    %623 = vmax.xlane.f32.xlu0 %v622
    %v624 = vpop.xlane.xlu0 %623
    %v625 = vmax.f32 %v554, %v555
    %626 = vmax.xlane.f32.xlu0 %v625
    %v627 = vpop.xlane.xlu0 %626
    %v628 = vmax.f32 %v556, %v557
    %629 = vmax.xlane.f32.xlu0 %v628
    %v630 = vpop.xlane.xlu0 %629
    %v631 = vmax.f32 %v558, %v559
    %632 = vmax.xlane.f32.xlu0 %v631
    %v633 = vpop.xlane.xlu0 %632
    %v634 = vmax.f32 %v560, %v561
    %635 = vmax.xlane.f32.xlu0 %v634
    %v636 = vpop.xlane.xlu0 %635
    %v637 = vmax.f32 %v562, %v563
    %638 = vmax.xlane.f32.xlu0 %v637
    %v639 = vpop.xlane.xlu0 %638
    %v640 = vmax.f32 %v564, %v565
    %641 = vmax.xlane.f32.xlu0 %v640
    %v642 = vpop.xlane.xlu0 %641
    %v643 = vmax.f32 %v566, %v567
    %644 = vmax.xlane.f32.xlu0 %v643
    %v645 = vpop.xlane.xlu0 %644
    %v646 = vmax.f32 %v568, %v569
    %647 = vmax.xlane.f32.xlu0 %v646
    %v648 = vpop.xlane.xlu0 %647
    %v649 = vmax.f32 %v570, %v571
    %650 = vmax.xlane.f32.xlu0 %v649
    %v651 = vpop.xlane.xlu0 %650
    %v652 = vmax.f32 %v572, %v573
    %653 = vmax.xlane.f32.xlu0 %v652
    %v654 = vpop.xlane.xlu0 %653
    %v655 = vmax.f32 %v574, %v575
    %656 = vmax.xlane.f32.xlu0 %v655
    %v657 = vpop.xlane.xlu0 %656
    %v658 = vmax.f32 %v576, %v577
    %659 = vmax.xlane.f32.xlu0 %v658
    %v660 = vpop.xlane.xlu0 %659
    %v661 = vmax.f32 %v578, %v579
    %662 = vmax.xlane.f32.xlu0 %v661
    %v663 = vpop.xlane.xlu0 %662
    %v664 = vmax.f32 %v580, %v581
    %665 = vmax.xlane.f32.xlu0 %v664
    %v666 = vpop.xlane.xlu0 %665
    %v667 = vmax.f32 %v582, %v583
    %668 = vmax.xlane.f32.xlu0 %v667
    %v669 = vpop.xlane.xlu0 %668
    %v670 = vmax.f32 %v584, %v585
    %671 = vmax.xlane.f32.xlu0 %v670
    %v672 = vpop.xlane.xlu0 %671
    %v673 = vmax.f32 %v586, %v587
    %674 = vmax.xlane.f32.xlu0 %v673
    %v675 = vpop.xlane.xlu0 %674
    %v676 = vmax.f32 %v588, %v589
    %677 = vmax.xlane.f32.xlu0 %v676
    %v678 = vpop.xlane.xlu0 %677
    %v679 = vmax.f32 %v590, %v591
    %680 = vmax.xlane.f32.xlu0 %v679
    %v681 = vpop.xlane.xlu0 %680
    %v682 = vmax.f32 %v592, %v593
    %683 = vmax.xlane.f32.xlu0 %v682
    %v684 = vpop.xlane.xlu0 %683
    %v685 = vmax.f32 %v594, %v595
    %686 = vmax.xlane.f32.xlu0 %v685
    %v687 = vpop.xlane.xlu0 %686
    %v688 = vmax.f32 %v596, %v597
    %689 = vmax.xlane.f32.xlu0 %v688
    %v690 = vpop.xlane.xlu0 %689
    %v691 = vmax.f32 %v598, %v599
    %692 = vmax.xlane.f32.xlu0 %v691
    %v693 = vpop.xlane.xlu0 %692
    %v694 = vmax.f32 %v600, %v601
    %695 = vmax.xlane.f32.xlu0 %v694
    %v696 = vpop.xlane.xlu0 %695
    %v697 = vmax.f32 %v602, %v603
    %698 = vmax.xlane.f32.xlu0 %v697
    %v699 = vpop.xlane.xlu0 %698
    %v700 = vmax.f32 %v604, %v605
    %701 = vmax.xlane.f32.xlu0 %v700
    %v702 = vpop.xlane.xlu0 %701
    %v703 = vmax.f32 %v606, %v607
    %704 = vmax.xlane.f32.xlu0 %v703
    %v705 = vpop.xlane.xlu0 %704
    %v706 = vmax.f32 %v608, %v609
    %707 = vmax.xlane.f32.xlu0 %v706
    %v708 = vpop.xlane.xlu0 %707
    %vm709 = vcmp.eq.f32.partialorder %v546, %v615
    %vm710 = vcmp.eq.f32.partialorder %v547, %v615
    %vm711 = vcmp.eq.f32.partialorder %v548, %v618
    %vm712 = vcmp.eq.f32.partialorder %v549, %v618
    %vm713 = vcmp.eq.f32.partialorder %v550, %v621
    %vm714 = vcmp.eq.f32.partialorder %v551, %v621
    %vm715 = vcmp.eq.f32.partialorder %v552, %v624
    %vm716 = vcmp.eq.f32.partialorder %v553, %v624
    %vm717 = vcmp.eq.f32.partialorder %v554, %v627
    %vm718 = vcmp.eq.f32.partialorder %v555, %v627
    %vm719 = vcmp.eq.f32.partialorder %v556, %v630
    %vm720 = vcmp.eq.f32.partialorder %v557, %v630
    %vm721 = vcmp.eq.f32.partialorder %v558, %v633
    %vm722 = vcmp.eq.f32.partialorder %v559, %v633
    %vm723 = vcmp.eq.f32.partialorder %v560, %v636
    %vm724 = vcmp.eq.f32.partialorder %v561, %v636
    %vm725 = vcmp.eq.f32.partialorder %v562, %v639
    %vm726 = vcmp.eq.f32.partialorder %v563, %v639
    %vm727 = vcmp.eq.f32.partialorder %v564, %v642
    %vm728 = vcmp.eq.f32.partialorder %v565, %v642
    %vm729 = vcmp.eq.f32.partialorder %v566, %v645
    %vm730 = vcmp.eq.f32.partialorder %v567, %v645
    %vm731 = vcmp.eq.f32.partialorder %v568, %v648
    %vm732 = vcmp.eq.f32.partialorder %v569, %v648
    %vm733 = vcmp.eq.f32.partialorder %v570, %v651
    %vm734 = vcmp.eq.f32.partialorder %v571, %v651
    %vm735 = vcmp.eq.f32.partialorder %v572, %v654
    %vm736 = vcmp.eq.f32.partialorder %v573, %v654
    %vm737 = vcmp.eq.f32.partialorder %v574, %v657
    %vm738 = vcmp.eq.f32.partialorder %v575, %v657
    %vm739 = vcmp.eq.f32.partialorder %v576, %v660
    %vm740 = vcmp.eq.f32.partialorder %v577, %v660
    %vm741 = vcmp.eq.f32.partialorder %v578, %v663
    %vm742 = vcmp.eq.f32.partialorder %v579, %v663
    %vm743 = vcmp.eq.f32.partialorder %v580, %v666
    %vm744 = vcmp.eq.f32.partialorder %v581, %v666
    %vm745 = vcmp.eq.f32.partialorder %v582, %v669
    %vm746 = vcmp.eq.f32.partialorder %v583, %v669
    %vm747 = vcmp.eq.f32.partialorder %v584, %v672
    %vm748 = vcmp.eq.f32.partialorder %v585, %v672
    %vm749 = vcmp.eq.f32.partialorder %v586, %v675
    %vm750 = vcmp.eq.f32.partialorder %v587, %v675
    %vm751 = vcmp.eq.f32.partialorder %v588, %v678
    %vm752 = vcmp.eq.f32.partialorder %v589, %v678
    %vm753 = vcmp.eq.f32.partialorder %v590, %v681
    %vm754 = vcmp.eq.f32.partialorder %v591, %v681
    %vm755 = vcmp.eq.f32.partialorder %v592, %v684
    %vm756 = vcmp.eq.f32.partialorder %v593, %v684
    %vm757 = vcmp.eq.f32.partialorder %v594, %v687
    %vm758 = vcmp.eq.f32.partialorder %v595, %v687
    %vm759 = vcmp.eq.f32.partialorder %v596, %v690
    %vm760 = vcmp.eq.f32.partialorder %v597, %v690
    %vm761 = vcmp.eq.f32.partialorder %v598, %v693
    %vm762 = vcmp.eq.f32.partialorder %v599, %v693
    %vm763 = vcmp.eq.f32.partialorder %v600, %v696
    %vm764 = vcmp.eq.f32.partialorder %v601, %v696
    %vm765 = vcmp.eq.f32.partialorder %v602, %v699
    %vm766 = vcmp.eq.f32.partialorder %v603, %v699
    %vm767 = vcmp.eq.f32.partialorder %v604, %v702
    %vm768 = vcmp.eq.f32.partialorder %v605, %v702
    %vm769 = vcmp.eq.f32.partialorder %v606, %v705
    %vm770 = vcmp.eq.f32.partialorder %v607, %v705
    %vm771 = vcmp.eq.f32.partialorder %v608, %v708
    %vm772 = vcmp.eq.f32.partialorder %v609, %v708
    %v773 = vsel %vm709, %v611, 256
    %v774 = vsel %vm710, %v612, 256
    %v775 = vsel %vm711, %v611, 256
    %v776 = vsel %vm712, %v612, 256
    %v777 = vsel %vm713, %v611, 256
    %v778 = vsel %vm714, %v612, 256
    %v779 = vsel %vm715, %v611, 256
    %v780 = vsel %vm716, %v612, 256
    %v781 = vsel %vm717, %v611, 256
    %v782 = vsel %vm718, %v612, 256
    %v783 = vsel %vm719, %v611, 256
    %v784 = vsel %vm720, %v612, 256
    %v785 = vsel %vm721, %v611, 256
    %v786 = vsel %vm722, %v612, 256
    %v787 = vsel %vm723, %v611, 256
    %v788 = vsel %vm724, %v612, 256
    %v789 = vsel %vm725, %v611, 256
    %v790 = vsel %vm726, %v612, 256
    %v791 = vsel %vm727, %v611, 256
    %v792 = vsel %vm728, %v612, 256
    %v793 = vsel %vm729, %v611, 256
    %v794 = vsel %vm730, %v612, 256
    %v795 = vsel %vm731, %v611, 256
    %v796 = vsel %vm732, %v612, 256
    %v797 = vsel %vm733, %v611, 256
    %v798 = vsel %vm734, %v612, 256
    %v799 = vsel %vm735, %v611, 256
    %v800 = vsel %vm736, %v612, 256
    %v801 = vsel %vm737, %v611, 256
    %v802 = vsel %vm738, %v612, 256
    %v803 = vsel %vm739, %v611, 256
    %v804 = vsel %vm740, %v612, 256
    %v805 = vsel %vm741, %v611, 256
    %v806 = vsel %vm742, %v612, 256
    %v807 = vsel %vm743, %v611, 256
    %v808 = vsel %vm744, %v612, 256
    %v809 = vsel %vm745, %v611, 256
    %v810 = vsel %vm746, %v612, 256
    %v811 = vsel %vm747, %v611, 256
    %v812 = vsel %vm748, %v612, 256
    %v813 = vsel %vm749, %v611, 256
    %v814 = vsel %vm750, %v612, 256
    %v815 = vsel %vm751, %v611, 256
    %v816 = vsel %vm752, %v612, 256
    %v817 = vsel %vm753, %v611, 256
    %v818 = vsel %vm754, %v612, 256
    %v819 = vsel %vm755, %v611, 256
    %v820 = vsel %vm756, %v612, 256
    %v821 = vsel %vm757, %v611, 256
    %v822 = vsel %vm758, %v612, 256
    %v823 = vsel %vm759, %v611, 256
    %v824 = vsel %vm760, %v612, 256
    %v825 = vsel %vm761, %v611, 256
    %v826 = vsel %vm762, %v612, 256
    %v827 = vsel %vm763, %v611, 256
    %v828 = vsel %vm764, %v612, 256
    %v829 = vsel %vm765, %v611, 256
    %v830 = vsel %vm766, %v612, 256
    %v831 = vsel %vm767, %v611, 256
    %v832 = vsel %vm768, %v612, 256
    %v833 = vsel %vm769, %v611, 256
    %v834 = vsel %vm770, %v612, 256
    %v835 = vsel %vm771, %v611, 256
    %v836 = vsel %vm772, %v612, 256
    %vm837 = vcmp.lt.s32.totalorder %v773, %v774
    %v838 = vsel %vm837, %v773, %v774
    %v839 = vand.u32 %v838, 65535
    %v840 = vshra.s32 %v838, 16
    %v841 = vcvt.s32.f32 %v839
    %v842 = vcvt.s32.f32 %v840
    %843 = vmin.xlane.f32.xlu0 %v842
    %v844 = vpop.xlane.xlu0 %843
    %vm845 = vcmp.eq.f32.partialorder %v842, %v844
    %v846 = vsel %vm845, %v841, inf
    %847 = vmin.xlane.f32.xlu0 %v846
    %v848 = vpop.xlane.xlu0 %847
    %v849 = vcvt.f32.s32 %v848
    %v850 = vcvt.f32.s32 %v844
    %v851 = vshll.u32 %v850, 16
    %v852 = vadd.s32 %v851, %v849
    %vm853 = vcmp.lt.s32.totalorder %v775, %v776
    %v854 = vsel %vm853, %v775, %v776
    %v855 = vand.u32 %v854, 65535
    %v856 = vshra.s32 %v854, 16
    %v857 = vcvt.s32.f32 %v855
    %v858 = vcvt.s32.f32 %v856
    %859 = vmin.xlane.f32.xlu0 %v858
    %v860 = vpop.xlane.xlu0 %859
    %vm861 = vcmp.eq.f32.partialorder %v858, %v860
    %v862 = vsel %vm861, %v857, inf
    %863 = vmin.xlane.f32.xlu0 %v862
    %v864 = vpop.xlane.xlu0 %863
    %v865 = vcvt.f32.s32 %v864
    %v866 = vcvt.f32.s32 %v860
    %v867 = vshll.u32 %v866, 16
    %v868 = vadd.s32 %v867, %v865
    %vm869 = vcmp.lt.s32.totalorder %v777, %v778
    %v870 = vsel %vm869, %v777, %v778
    %v871 = vand.u32 %v870, 65535
    %v872 = vshra.s32 %v870, 16
    %v873 = vcvt.s32.f32 %v871
    %v874 = vcvt.s32.f32 %v872
    %875 = vmin.xlane.f32.xlu0 %v874
    %v876 = vpop.xlane.xlu0 %875
    %vm877 = vcmp.eq.f32.partialorder %v874, %v876
    %v878 = vsel %vm877, %v873, inf
    %879 = vmin.xlane.f32.xlu0 %v878
    %v880 = vpop.xlane.xlu0 %879
    %v881 = vcvt.f32.s32 %v880
    %v882 = vcvt.f32.s32 %v876
    %v883 = vshll.u32 %v882, 16
    %v884 = vadd.s32 %v883, %v881
    %vm885 = vcmp.lt.s32.totalorder %v779, %v780
    %v886 = vsel %vm885, %v779, %v780
    %v887 = vand.u32 %v886, 65535
    %v888 = vshra.s32 %v886, 16
    %v889 = vcvt.s32.f32 %v887
    %v890 = vcvt.s32.f32 %v888
    %891 = vmin.xlane.f32.xlu0 %v890
    %v892 = vpop.xlane.xlu0 %891
    %vm893 = vcmp.eq.f32.partialorder %v890, %v892
    %v894 = vsel %vm893, %v889, inf
    %895 = vmin.xlane.f32.xlu0 %v894
    %v896 = vpop.xlane.xlu0 %895
    %v897 = vcvt.f32.s32 %v896
    %v898 = vcvt.f32.s32 %v892
    %v899 = vshll.u32 %v898, 16
    %v900 = vadd.s32 %v899, %v897
    %vm901 = vcmp.lt.s32.totalorder %v781, %v782
    %v902 = vsel %vm901, %v781, %v782
    %v903 = vand.u32 %v902, 65535
    %v904 = vshra.s32 %v902, 16
    %v905 = vcvt.s32.f32 %v903
    %v906 = vcvt.s32.f32 %v904
    %907 = vmin.xlane.f32.xlu0 %v906
    %v908 = vpop.xlane.xlu0 %907
    %vm909 = vcmp.eq.f32.partialorder %v906, %v908
    %v910 = vsel %vm909, %v905, inf
    %911 = vmin.xlane.f32.xlu0 %v910
    %v912 = vpop.xlane.xlu0 %911
    %v913 = vcvt.f32.s32 %v912
    %v914 = vcvt.f32.s32 %v908
    %v915 = vshll.u32 %v914, 16
    %v916 = vadd.s32 %v915, %v913
    %vm917 = vcmp.lt.s32.totalorder %v783, %v784
    %v918 = vsel %vm917, %v783, %v784
    %v919 = vand.u32 %v918, 65535
    %v920 = vshra.s32 %v918, 16
    %v921 = vcvt.s32.f32 %v919
    %v922 = vcvt.s32.f32 %v920
    %923 = vmin.xlane.f32.xlu0 %v922
    %v924 = vpop.xlane.xlu0 %923
    %vm925 = vcmp.eq.f32.partialorder %v922, %v924
    %v926 = vsel %vm925, %v921, inf
    %927 = vmin.xlane.f32.xlu0 %v926
    %v928 = vpop.xlane.xlu0 %927
    %v929 = vcvt.f32.s32 %v928
    %v930 = vcvt.f32.s32 %v924
    %v931 = vshll.u32 %v930, 16
    %v932 = vadd.s32 %v931, %v929
    %vm933 = vcmp.lt.s32.totalorder %v785, %v786
    %v934 = vsel %vm933, %v785, %v786
    %v935 = vand.u32 %v934, 65535
    %v936 = vshra.s32 %v934, 16
    %v937 = vcvt.s32.f32 %v935
    %v938 = vcvt.s32.f32 %v936
    %939 = vmin.xlane.f32.xlu0 %v938
    %v940 = vpop.xlane.xlu0 %939
    %vm941 = vcmp.eq.f32.partialorder %v938, %v940
    %v942 = vsel %vm941, %v937, inf
    %943 = vmin.xlane.f32.xlu0 %v942
    %v944 = vpop.xlane.xlu0 %943
    %v945 = vcvt.f32.s32 %v944
    %v946 = vcvt.f32.s32 %v940
    %v947 = vshll.u32 %v946, 16
    %v948 = vadd.s32 %v947, %v945
    %vm949 = vcmp.lt.s32.totalorder %v787, %v788
    %v950 = vsel %vm949, %v787, %v788
    %v951 = vand.u32 %v950, 65535
    %v952 = vshra.s32 %v950, 16
    %v953 = vcvt.s32.f32 %v951
    %v954 = vcvt.s32.f32 %v952
    %955 = vmin.xlane.f32.xlu0 %v954
    %v956 = vpop.xlane.xlu0 %955
    %vm957 = vcmp.eq.f32.partialorder %v954, %v956
    %v958 = vsel %vm957, %v953, inf
    %959 = vmin.xlane.f32.xlu0 %v958
    %v960 = vpop.xlane.xlu0 %959
    %v961 = vcvt.f32.s32 %v960
    %v962 = vcvt.f32.s32 %v956
    %v963 = vshll.u32 %v962, 16
    %v964 = vadd.s32 %v963, %v961
    %vm965 = vcmp.lt.s32.totalorder %v789, %v790
    %v966 = vsel %vm965, %v789, %v790
    %v967 = vand.u32 %v966, 65535
    %v968 = vshra.s32 %v966, 16
    %v969 = vcvt.s32.f32 %v967
    %v970 = vcvt.s32.f32 %v968
    %971 = vmin.xlane.f32.xlu0 %v970
    %v972 = vpop.xlane.xlu0 %971
    %vm973 = vcmp.eq.f32.partialorder %v970, %v972
    %v974 = vsel %vm973, %v969, inf
    %975 = vmin.xlane.f32.xlu0 %v974
    %v976 = vpop.xlane.xlu0 %975
    %v977 = vcvt.f32.s32 %v976
    %v978 = vcvt.f32.s32 %v972
    %v979 = vshll.u32 %v978, 16
    %v980 = vadd.s32 %v979, %v977
    %vm981 = vcmp.lt.s32.totalorder %v791, %v792
    %v982 = vsel %vm981, %v791, %v792
    %v983 = vand.u32 %v982, 65535
    %v984 = vshra.s32 %v982, 16
    %v985 = vcvt.s32.f32 %v983
    %v986 = vcvt.s32.f32 %v984
    %987 = vmin.xlane.f32.xlu0 %v986
    %v988 = vpop.xlane.xlu0 %987
    %vm989 = vcmp.eq.f32.partialorder %v986, %v988
    %v990 = vsel %vm989, %v985, inf
    %991 = vmin.xlane.f32.xlu0 %v990
    %v992 = vpop.xlane.xlu0 %991
    %v993 = vcvt.f32.s32 %v992
    %v994 = vcvt.f32.s32 %v988
    %v995 = vshll.u32 %v994, 16
    %v996 = vadd.s32 %v995, %v993
    %vm997 = vcmp.lt.s32.totalorder %v793, %v794
    %v998 = vsel %vm997, %v793, %v794
    %v999 = vand.u32 %v998, 65535
    %v1000 = vshra.s32 %v998, 16
    %v1001 = vcvt.s32.f32 %v999
    %v1002 = vcvt.s32.f32 %v1000
    %1003 = vmin.xlane.f32.xlu0 %v1002
    %v1004 = vpop.xlane.xlu0 %1003
    %vm1005 = vcmp.eq.f32.partialorder %v1002, %v1004
    %v1006 = vsel %vm1005, %v1001, inf
    %1007 = vmin.xlane.f32.xlu0 %v1006
    %v1008 = vpop.xlane.xlu0 %1007
    %v1009 = vcvt.f32.s32 %v1008
    %v1010 = vcvt.f32.s32 %v1004
    %v1011 = vshll.u32 %v1010, 16
    %v1012 = vadd.s32 %v1011, %v1009
    %vm1013 = vcmp.lt.s32.totalorder %v795, %v796
    %v1014 = vsel %vm1013, %v795, %v796
    %v1015 = vand.u32 %v1014, 65535
    %v1016 = vshra.s32 %v1014, 16
    %v1017 = vcvt.s32.f32 %v1015
    %v1018 = vcvt.s32.f32 %v1016
    %1019 = vmin.xlane.f32.xlu0 %v1018
    %v1020 = vpop.xlane.xlu0 %1019
    %vm1021 = vcmp.eq.f32.partialorder %v1018, %v1020
    %v1022 = vsel %vm1021, %v1017, inf
    %1023 = vmin.xlane.f32.xlu0 %v1022
    %v1024 = vpop.xlane.xlu0 %1023
    %v1025 = vcvt.f32.s32 %v1024
    %v1026 = vcvt.f32.s32 %v1020
    %v1027 = vshll.u32 %v1026, 16
    %v1028 = vadd.s32 %v1027, %v1025
    %vm1029 = vcmp.lt.s32.totalorder %v797, %v798
    %v1030 = vsel %vm1029, %v797, %v798
    %v1031 = vand.u32 %v1030, 65535
    %v1032 = vshra.s32 %v1030, 16
    %v1033 = vcvt.s32.f32 %v1031
    %v1034 = vcvt.s32.f32 %v1032
    %1035 = vmin.xlane.f32.xlu0 %v1034
    %v1036 = vpop.xlane.xlu0 %1035
    %vm1037 = vcmp.eq.f32.partialorder %v1034, %v1036
    %v1038 = vsel %vm1037, %v1033, inf
    %1039 = vmin.xlane.f32.xlu0 %v1038
    %v1040 = vpop.xlane.xlu0 %1039
    %v1041 = vcvt.f32.s32 %v1040
    %v1042 = vcvt.f32.s32 %v1036
    %v1043 = vshll.u32 %v1042, 16
    %v1044 = vadd.s32 %v1043, %v1041
    %vm1045 = vcmp.lt.s32.totalorder %v799, %v800
    %v1046 = vsel %vm1045, %v799, %v800
    %v1047 = vand.u32 %v1046, 65535
    %v1048 = vshra.s32 %v1046, 16
    %v1049 = vcvt.s32.f32 %v1047
    %v1050 = vcvt.s32.f32 %v1048
    %1051 = vmin.xlane.f32.xlu0 %v1050
    %v1052 = vpop.xlane.xlu0 %1051
    %vm1053 = vcmp.eq.f32.partialorder %v1050, %v1052
    %v1054 = vsel %vm1053, %v1049, inf
    %1055 = vmin.xlane.f32.xlu0 %v1054
    %v1056 = vpop.xlane.xlu0 %1055
    %v1057 = vcvt.f32.s32 %v1056
    %v1058 = vcvt.f32.s32 %v1052
    %v1059 = vshll.u32 %v1058, 16
    %v1060 = vadd.s32 %v1059, %v1057
    %vm1061 = vcmp.lt.s32.totalorder %v801, %v802
    %v1062 = vsel %vm1061, %v801, %v802
    %v1063 = vand.u32 %v1062, 65535
    %v1064 = vshra.s32 %v1062, 16
    %v1065 = vcvt.s32.f32 %v1063
    %v1066 = vcvt.s32.f32 %v1064
    %1067 = vmin.xlane.f32.xlu0 %v1066
    %v1068 = vpop.xlane.xlu0 %1067
    %vm1069 = vcmp.eq.f32.partialorder %v1066, %v1068
    %v1070 = vsel %vm1069, %v1065, inf
    %1071 = vmin.xlane.f32.xlu0 %v1070
    %v1072 = vpop.xlane.xlu0 %1071
    %v1073 = vcvt.f32.s32 %v1072
    %v1074 = vcvt.f32.s32 %v1068
    %v1075 = vshll.u32 %v1074, 16
    %v1076 = vadd.s32 %v1075, %v1073
    %vm1077 = vcmp.lt.s32.totalorder %v803, %v804
    %v1078 = vsel %vm1077, %v803, %v804
    %v1079 = vand.u32 %v1078, 65535
    %v1080 = vshra.s32 %v1078, 16
    %v1081 = vcvt.s32.f32 %v1079
    %v1082 = vcvt.s32.f32 %v1080
    %1083 = vmin.xlane.f32.xlu0 %v1082
    %v1084 = vpop.xlane.xlu0 %1083
    %vm1085 = vcmp.eq.f32.partialorder %v1082, %v1084
    %v1086 = vsel %vm1085, %v1081, inf
    %1087 = vmin.xlane.f32.xlu0 %v1086
    %v1088 = vpop.xlane.xlu0 %1087
    %v1089 = vcvt.f32.s32 %v1088
    %v1090 = vcvt.f32.s32 %v1084
    %v1091 = vshll.u32 %v1090, 16
    %v1092 = vadd.s32 %v1091, %v1089
    %vm1093 = vcmp.lt.s32.totalorder %v805, %v806
    %v1094 = vsel %vm1093, %v805, %v806
    %v1095 = vand.u32 %v1094, 65535
    %v1096 = vshra.s32 %v1094, 16
    %v1097 = vcvt.s32.f32 %v1095
    %v1098 = vcvt.s32.f32 %v1096
    %1099 = vmin.xlane.f32.xlu0 %v1098
    %v1100 = vpop.xlane.xlu0 %1099
    %vm1101 = vcmp.eq.f32.partialorder %v1098, %v1100
    %v1102 = vsel %vm1101, %v1097, inf
    %1103 = vmin.xlane.f32.xlu0 %v1102
    %v1104 = vpop.xlane.xlu0 %1103
    %v1105 = vcvt.f32.s32 %v1104
    %v1106 = vcvt.f32.s32 %v1100
    %v1107 = vshll.u32 %v1106, 16
    %v1108 = vadd.s32 %v1107, %v1105
    %vm1109 = vcmp.lt.s32.totalorder %v807, %v808
    %v1110 = vsel %vm1109, %v807, %v808
    %v1111 = vand.u32 %v1110, 65535
    %v1112 = vshra.s32 %v1110, 16
    %v1113 = vcvt.s32.f32 %v1111
    %v1114 = vcvt.s32.f32 %v1112
    %1115 = vmin.xlane.f32.xlu0 %v1114
    %v1116 = vpop.xlane.xlu0 %1115
    %vm1117 = vcmp.eq.f32.partialorder %v1114, %v1116
    %v1118 = vsel %vm1117, %v1113, inf
    %1119 = vmin.xlane.f32.xlu0 %v1118
    %v1120 = vpop.xlane.xlu0 %1119
    %v1121 = vcvt.f32.s32 %v1120
    %v1122 = vcvt.f32.s32 %v1116
    %v1123 = vshll.u32 %v1122, 16
    %v1124 = vadd.s32 %v1123, %v1121
    %vm1125 = vcmp.lt.s32.totalorder %v809, %v810
    %v1126 = vsel %vm1125, %v809, %v810
    %v1127 = vand.u32 %v1126, 65535
    %v1128 = vshra.s32 %v1126, 16
    %v1129 = vcvt.s32.f32 %v1127
    %v1130 = vcvt.s32.f32 %v1128
    %1131 = vmin.xlane.f32.xlu0 %v1130
    %v1132 = vpop.xlane.xlu0 %1131
    %vm1133 = vcmp.eq.f32.partialorder %v1130, %v1132
    %v1134 = vsel %vm1133, %v1129, inf
    %1135 = vmin.xlane.f32.xlu0 %v1134
    %v1136 = vpop.xlane.xlu0 %1135
    %v1137 = vcvt.f32.s32 %v1136
    %v1138 = vcvt.f32.s32 %v1132
    %v1139 = vshll.u32 %v1138, 16
    %v1140 = vadd.s32 %v1139, %v1137
    %vm1141 = vcmp.lt.s32.totalorder %v811, %v812
    %v1142 = vsel %vm1141, %v811, %v812
    %v1143 = vand.u32 %v1142, 65535
    %v1144 = vshra.s32 %v1142, 16
    %v1145 = vcvt.s32.f32 %v1143
    %v1146 = vcvt.s32.f32 %v1144
    %1147 = vmin.xlane.f32.xlu0 %v1146
    %v1148 = vpop.xlane.xlu0 %1147
    %vm1149 = vcmp.eq.f32.partialorder %v1146, %v1148
    %v1150 = vsel %vm1149, %v1145, inf
    %1151 = vmin.xlane.f32.xlu0 %v1150
    %v1152 = vpop.xlane.xlu0 %1151
    %v1153 = vcvt.f32.s32 %v1152
    %v1154 = vcvt.f32.s32 %v1148
    %v1155 = vshll.u32 %v1154, 16
    %v1156 = vadd.s32 %v1155, %v1153
    %vm1157 = vcmp.lt.s32.totalorder %v813, %v814
    %v1158 = vsel %vm1157, %v813, %v814
    %v1159 = vand.u32 %v1158, 65535
    %v1160 = vshra.s32 %v1158, 16
    %v1161 = vcvt.s32.f32 %v1159
    %v1162 = vcvt.s32.f32 %v1160
    %1163 = vmin.xlane.f32.xlu0 %v1162
    %v1164 = vpop.xlane.xlu0 %1163
    %vm1165 = vcmp.eq.f32.partialorder %v1162, %v1164
    %v1166 = vsel %vm1165, %v1161, inf
    %1167 = vmin.xlane.f32.xlu0 %v1166
    %v1168 = vpop.xlane.xlu0 %1167
    %v1169 = vcvt.f32.s32 %v1168
    %v1170 = vcvt.f32.s32 %v1164
    %v1171 = vshll.u32 %v1170, 16
    %v1172 = vadd.s32 %v1171, %v1169
    %vm1173 = vcmp.lt.s32.totalorder %v815, %v816
    %v1174 = vsel %vm1173, %v815, %v816
    %v1175 = vand.u32 %v1174, 65535
    %v1176 = vshra.s32 %v1174, 16
    %v1177 = vcvt.s32.f32 %v1175
    %v1178 = vcvt.s32.f32 %v1176
    %1179 = vmin.xlane.f32.xlu0 %v1178
    %v1180 = vpop.xlane.xlu0 %1179
    %vm1181 = vcmp.eq.f32.partialorder %v1178, %v1180
    %v1182 = vsel %vm1181, %v1177, inf
    %1183 = vmin.xlane.f32.xlu0 %v1182
    %v1184 = vpop.xlane.xlu0 %1183
    %v1185 = vcvt.f32.s32 %v1184
    %v1186 = vcvt.f32.s32 %v1180
    %v1187 = vshll.u32 %v1186, 16
    %v1188 = vadd.s32 %v1187, %v1185
    %vm1189 = vcmp.lt.s32.totalorder %v817, %v818
    %v1190 = vsel %vm1189, %v817, %v818
    %v1191 = vand.u32 %v1190, 65535
    %v1192 = vshra.s32 %v1190, 16
    %v1193 = vcvt.s32.f32 %v1191
    %v1194 = vcvt.s32.f32 %v1192
    %1195 = vmin.xlane.f32.xlu0 %v1194
    %v1196 = vpop.xlane.xlu0 %1195
    %vm1197 = vcmp.eq.f32.partialorder %v1194, %v1196
    %v1198 = vsel %vm1197, %v1193, inf
    %1199 = vmin.xlane.f32.xlu0 %v1198
    %v1200 = vpop.xlane.xlu0 %1199
    %v1201 = vcvt.f32.s32 %v1200
    %v1202 = vcvt.f32.s32 %v1196
    %v1203 = vshll.u32 %v1202, 16
    %v1204 = vadd.s32 %v1203, %v1201
    %vm1205 = vcmp.lt.s32.totalorder %v819, %v820
    %v1206 = vsel %vm1205, %v819, %v820
    %v1207 = vand.u32 %v1206, 65535
    %v1208 = vshra.s32 %v1206, 16
    %v1209 = vcvt.s32.f32 %v1207
    %v1210 = vcvt.s32.f32 %v1208
    %1211 = vmin.xlane.f32.xlu0 %v1210
    %v1212 = vpop.xlane.xlu0 %1211
    %vm1213 = vcmp.eq.f32.partialorder %v1210, %v1212
    %v1214 = vsel %vm1213, %v1209, inf
    %1215 = vmin.xlane.f32.xlu0 %v1214
    %v1216 = vpop.xlane.xlu0 %1215
    %v1217 = vcvt.f32.s32 %v1216
    %v1218 = vcvt.f32.s32 %v1212
    %v1219 = vshll.u32 %v1218, 16
    %v1220 = vadd.s32 %v1219, %v1217
    %vm1221 = vcmp.lt.s32.totalorder %v821, %v822
    %v1222 = vsel %vm1221, %v821, %v822
    %v1223 = vand.u32 %v1222, 65535
    %v1224 = vshra.s32 %v1222, 16
    %v1225 = vcvt.s32.f32 %v1223
    %v1226 = vcvt.s32.f32 %v1224
    %1227 = vmin.xlane.f32.xlu0 %v1226
    %v1228 = vpop.xlane.xlu0 %1227
    %vm1229 = vcmp.eq.f32.partialorder %v1226, %v1228
    %v1230 = vsel %vm1229, %v1225, inf
    %1231 = vmin.xlane.f32.xlu0 %v1230
    %v1232 = vpop.xlane.xlu0 %1231
    %v1233 = vcvt.f32.s32 %v1232
    %v1234 = vcvt.f32.s32 %v1228
    %v1235 = vshll.u32 %v1234, 16
    %v1236 = vadd.s32 %v1235, %v1233
    %vm1237 = vcmp.lt.s32.totalorder %v823, %v824
    %v1238 = vsel %vm1237, %v823, %v824
    %v1239 = vand.u32 %v1238, 65535
    %v1240 = vshra.s32 %v1238, 16
    %v1241 = vcvt.s32.f32 %v1239
    %v1242 = vcvt.s32.f32 %v1240
    %1243 = vmin.xlane.f32.xlu0 %v1242
    %v1244 = vpop.xlane.xlu0 %1243
    %vm1245 = vcmp.eq.f32.partialorder %v1242, %v1244
    %v1246 = vsel %vm1245, %v1241, inf
    %1247 = vmin.xlane.f32.xlu0 %v1246
    %v1248 = vpop.xlane.xlu0 %1247
    %v1249 = vcvt.f32.s32 %v1248
    %v1250 = vcvt.f32.s32 %v1244
    %v1251 = vshll.u32 %v1250, 16
    %v1252 = vadd.s32 %v1251, %v1249
    %vm1253 = vcmp.lt.s32.totalorder %v825, %v826
    %v1254 = vsel %vm1253, %v825, %v826
    %v1255 = vand.u32 %v1254, 65535
    %v1256 = vshra.s32 %v1254, 16
    %v1257 = vcvt.s32.f32 %v1255
    %v1258 = vcvt.s32.f32 %v1256
    %1259 = vmin.xlane.f32.xlu0 %v1258
    %v1260 = vpop.xlane.xlu0 %1259
    %vm1261 = vcmp.eq.f32.partialorder %v1258, %v1260
    %v1262 = vsel %vm1261, %v1257, inf
    %1263 = vmin.xlane.f32.xlu0 %v1262
    %v1264 = vpop.xlane.xlu0 %1263
    %v1265 = vcvt.f32.s32 %v1264
    %v1266 = vcvt.f32.s32 %v1260
    %v1267 = vshll.u32 %v1266, 16
    %v1268 = vadd.s32 %v1267, %v1265
    %vm1269 = vcmp.lt.s32.totalorder %v827, %v828
    %v1270 = vsel %vm1269, %v827, %v828
    %v1271 = vand.u32 %v1270, 65535
    %v1272 = vshra.s32 %v1270, 16
    %v1273 = vcvt.s32.f32 %v1271
    %v1274 = vcvt.s32.f32 %v1272
    %1275 = vmin.xlane.f32.xlu0 %v1274
    %v1276 = vpop.xlane.xlu0 %1275
    %vm1277 = vcmp.eq.f32.partialorder %v1274, %v1276
    %v1278 = vsel %vm1277, %v1273, inf
    %1279 = vmin.xlane.f32.xlu0 %v1278
    %v1280 = vpop.xlane.xlu0 %1279
    %v1281 = vcvt.f32.s32 %v1280
    %v1282 = vcvt.f32.s32 %v1276
    %v1283 = vshll.u32 %v1282, 16
    %v1284 = vadd.s32 %v1283, %v1281
    %vm1285 = vcmp.lt.s32.totalorder %v829, %v830
    %v1286 = vsel %vm1285, %v829, %v830
    %v1287 = vand.u32 %v1286, 65535
    %v1288 = vshra.s32 %v1286, 16
    %v1289 = vcvt.s32.f32 %v1287
    %v1290 = vcvt.s32.f32 %v1288
    %1291 = vmin.xlane.f32.xlu0 %v1290
    %v1292 = vpop.xlane.xlu0 %1291
    %vm1293 = vcmp.eq.f32.partialorder %v1290, %v1292
    %v1294 = vsel %vm1293, %v1289, inf
    %1295 = vmin.xlane.f32.xlu0 %v1294
    %v1296 = vpop.xlane.xlu0 %1295
    %v1297 = vcvt.f32.s32 %v1296
    %v1298 = vcvt.f32.s32 %v1292
    %v1299 = vshll.u32 %v1298, 16
    %v1300 = vadd.s32 %v1299, %v1297
    %vm1301 = vcmp.lt.s32.totalorder %v831, %v832
    %v1302 = vsel %vm1301, %v831, %v832
    %v1303 = vand.u32 %v1302, 65535
    %v1304 = vshra.s32 %v1302, 16
    %v1305 = vcvt.s32.f32 %v1303
    %v1306 = vcvt.s32.f32 %v1304
    %1307 = vmin.xlane.f32.xlu0 %v1306
    %v1308 = vpop.xlane.xlu0 %1307
    %vm1309 = vcmp.eq.f32.partialorder %v1306, %v1308
    %v1310 = vsel %vm1309, %v1305, inf
    %1311 = vmin.xlane.f32.xlu0 %v1310
    %v1312 = vpop.xlane.xlu0 %1311
    %v1313 = vcvt.f32.s32 %v1312
    %v1314 = vcvt.f32.s32 %v1308
    %v1315 = vshll.u32 %v1314, 16
    %v1316 = vadd.s32 %v1315, %v1313
    %vm1317 = vcmp.lt.s32.totalorder %v833, %v834
    %v1318 = vsel %vm1317, %v833, %v834
    %v1319 = vand.u32 %v1318, 65535
    %v1320 = vshra.s32 %v1318, 16
    %v1321 = vcvt.s32.f32 %v1319
    %v1322 = vcvt.s32.f32 %v1320
    %1323 = vmin.xlane.f32.xlu0 %v1322
    %v1324 = vpop.xlane.xlu0 %1323
    %vm1325 = vcmp.eq.f32.partialorder %v1322, %v1324
    %v1326 = vsel %vm1325, %v1321, inf
    %1327 = vmin.xlane.f32.xlu0 %v1326
    %v1328 = vpop.xlane.xlu0 %1327
    %v1329 = vcvt.f32.s32 %v1328
    %v1330 = vcvt.f32.s32 %v1324
    %v1331 = vshll.u32 %v1330, 16
    %v1332 = vadd.s32 %v1331, %v1329
    %vm1333 = vcmp.lt.s32.totalorder %v835, %v836
    %v1334 = vsel %vm1333, %v835, %v836
    %v1335 = vand.u32 %v1334, 65535
    %v1336 = vshra.s32 %v1334, 16
    %v1337 = vcvt.s32.f32 %v1335
    %v1338 = vcvt.s32.f32 %v1336
    %1339 = vmin.xlane.f32.xlu0 %v1338
    %v1340 = vpop.xlane.xlu0 %1339
    %vm1341 = vcmp.eq.f32.partialorder %v1338, %v1340
    %v1342 = vsel %vm1341, %v1337, inf
    %1343 = vmin.xlane.f32.xlu0 %v1342
    %v1344 = vpop.xlane.xlu0 %1343
    %v1345 = vcvt.f32.s32 %v1344
    %v1346 = vcvt.f32.s32 %v1340
    %v1347 = vshll.u32 %v1346, 16
    %v1348 = vadd.s32 %v1347, %v1345
    %vm1349 = vcmp.eq.s32.totalorder %v611, %v852
    %vm1350 = vcmp.eq.s32.totalorder %v612, %v852
    %vm1351 = vcmp.eq.s32.totalorder %v611, %v868
    %vm1352 = vcmp.eq.s32.totalorder %v612, %v868
    %vm1353 = vcmp.eq.s32.totalorder %v611, %v884
    %vm1354 = vcmp.eq.s32.totalorder %v612, %v884
    %vm1355 = vcmp.eq.s32.totalorder %v611, %v900
    %vm1356 = vcmp.eq.s32.totalorder %v612, %v900
    %vm1357 = vcmp.eq.s32.totalorder %v611, %v916
    %vm1358 = vcmp.eq.s32.totalorder %v612, %v916
    %vm1359 = vcmp.eq.s32.totalorder %v611, %v932
    %vm1360 = vcmp.eq.s32.totalorder %v612, %v932
    %vm1361 = vcmp.eq.s32.totalorder %v611, %v948
    %vm1362 = vcmp.eq.s32.totalorder %v612, %v948
    %vm1363 = vcmp.eq.s32.totalorder %v611, %v964
    %vm1364 = vcmp.eq.s32.totalorder %v612, %v964
    %vm1365 = vcmp.eq.s32.totalorder %v611, %v980
    %vm1366 = vcmp.eq.s32.totalorder %v612, %v980
    %vm1367 = vcmp.eq.s32.totalorder %v611, %v996
    %vm1368 = vcmp.eq.s32.totalorder %v612, %v996
    %vm1369 = vcmp.eq.s32.totalorder %v611, %v1012
    %vm1370 = vcmp.eq.s32.totalorder %v612, %v1012
    %vm1371 = vcmp.eq.s32.totalorder %v611, %v1028
    %vm1372 = vcmp.eq.s32.totalorder %v612, %v1028
    %vm1373 = vcmp.eq.s32.totalorder %v611, %v1044
    %vm1374 = vcmp.eq.s32.totalorder %v612, %v1044
    %vm1375 = vcmp.eq.s32.totalorder %v611, %v1060
    %vm1376 = vcmp.eq.s32.totalorder %v612, %v1060
    %vm1377 = vcmp.eq.s32.totalorder %v611, %v1076
    %vm1378 = vcmp.eq.s32.totalorder %v612, %v1076
    %vm1379 = vcmp.eq.s32.totalorder %v611, %v1092
    %vm1380 = vcmp.eq.s32.totalorder %v612, %v1092
    %vm1381 = vcmp.eq.s32.totalorder %v611, %v1108
    %vm1382 = vcmp.eq.s32.totalorder %v612, %v1108
    %vm1383 = vcmp.eq.s32.totalorder %v611, %v1124
    %vm1384 = vcmp.eq.s32.totalorder %v612, %v1124
    %vm1385 = vcmp.eq.s32.totalorder %v611, %v1140
    %vm1386 = vcmp.eq.s32.totalorder %v612, %v1140
    %vm1387 = vcmp.eq.s32.totalorder %v611, %v1156
    %vm1388 = vcmp.eq.s32.totalorder %v612, %v1156
    %vm1389 = vcmp.eq.s32.totalorder %v611, %v1172
    %vm1390 = vcmp.eq.s32.totalorder %v612, %v1172
    %vm1391 = vcmp.eq.s32.totalorder %v611, %v1188
    %vm1392 = vcmp.eq.s32.totalorder %v612, %v1188
    %vm1393 = vcmp.eq.s32.totalorder %v611, %v1204
    %vm1394 = vcmp.eq.s32.totalorder %v612, %v1204
    %vm1395 = vcmp.eq.s32.totalorder %v611, %v1220
    %vm1396 = vcmp.eq.s32.totalorder %v612, %v1220
    %vm1397 = vcmp.eq.s32.totalorder %v611, %v1236
    %vm1398 = vcmp.eq.s32.totalorder %v612, %v1236
    %vm1399 = vcmp.eq.s32.totalorder %v611, %v1252
    %vm1400 = vcmp.eq.s32.totalorder %v612, %v1252
    %vm1401 = vcmp.eq.s32.totalorder %v611, %v1268
    %vm1402 = vcmp.eq.s32.totalorder %v612, %v1268
    %vm1403 = vcmp.eq.s32.totalorder %v611, %v1284
    %vm1404 = vcmp.eq.s32.totalorder %v612, %v1284
    %vm1405 = vcmp.eq.s32.totalorder %v611, %v1300
    %vm1406 = vcmp.eq.s32.totalorder %v612, %v1300
    %vm1407 = vcmp.eq.s32.totalorder %v611, %v1316
    %vm1408 = vcmp.eq.s32.totalorder %v612, %v1316
    %vm1409 = vcmp.eq.s32.totalorder %v611, %v1332
    %vm1410 = vcmp.eq.s32.totalorder %v612, %v1332
    %vm1411 = vcmp.eq.s32.totalorder %v611, %v1348
    %vm1412 = vcmp.eq.s32.totalorder %v612, %v1348
    %v1413 = vlaneseq
    %v1414 = vshrl.u32 %v1413, 7
    %v1415 = vsub.s32 2, %v1414
    %v1416 = vrot.slane %v464, %v1415
    %v1417 = vlaneseq
    %v1418 = vshrl.u32 %v1417, 7
    %v1419 = vsub.s32 2, %v1418
    %v1420 = vrot.slane %v465, %v1419
    %v1421 = vmul.f32 %v306, %v1416
    %v1422 = vmul.f32 %v308, %v1420
    %v1423 = vmul.f32 %v310, %v1416
    %v1424 = vmul.f32 %v312, %v1420
    %v1425 = vmul.f32 %v316, %v1416
    %v1426 = vmul.f32 %v318, %v1420
    %v1427 = vmul.f32 %v320, %v1416
    %v1428 = vmul.f32 %v322, %v1420
    %v1429 = vmul.f32 %v326, %v1416
    %v1430 = vmul.f32 %v328, %v1420
    %v1431 = vmul.f32 %v330, %v1416
    %v1432 = vmul.f32 %v332, %v1420
    %v1433 = vmul.f32 %v336, %v1416
    %v1434 = vmul.f32 %v338, %v1420
    %v1435 = vmul.f32 %v340, %v1416
    %v1436 = vmul.f32 %v342, %v1420
    %v1437 = vmul.f32 %v346, %v1416
    %v1438 = vmul.f32 %v348, %v1420
    %v1439 = vmul.f32 %v350, %v1416
    %v1440 = vmul.f32 %v352, %v1420
    %v1441 = vmul.f32 %v356, %v1416
    %v1442 = vmul.f32 %v358, %v1420
    %v1443 = vmul.f32 %v360, %v1416
    %v1444 = vmul.f32 %v362, %v1420
    %v1445 = vmul.f32 %v366, %v1416
    %v1446 = vmul.f32 %v368, %v1420
    %v1447 = vmul.f32 %v370, %v1416
    %v1448 = vmul.f32 %v372, %v1420
    %v1449 = vmul.f32 %v376, %v1416
    %v1450 = vmul.f32 %v378, %v1420
    %v1451 = vmul.f32 %v380, %v1416
    %v1452 = vmul.f32 %v382, %v1420
    %v1453 = vmul.f32 %v386, %v1416
    %v1454 = vmul.f32 %v388, %v1420
    %v1455 = vmul.f32 %v390, %v1416
    %v1456 = vmul.f32 %v392, %v1420
    %v1457 = vmul.f32 %v396, %v1416
    %v1458 = vmul.f32 %v398, %v1420
    %v1459 = vmul.f32 %v400, %v1416
    %v1460 = vmul.f32 %v402, %v1420
    %v1461 = vmul.f32 %v406, %v1416
    %v1462 = vmul.f32 %v408, %v1420
    %v1463 = vmul.f32 %v410, %v1416
    %v1464 = vmul.f32 %v412, %v1420
    %v1465 = vmul.f32 %v416, %v1416
    %v1466 = vmul.f32 %v418, %v1420
    %v1467 = vmul.f32 %v420, %v1416
    %v1468 = vmul.f32 %v422, %v1420
    %v1469 = vmul.f32 %v426, %v1416
    %v1470 = vmul.f32 %v428, %v1420
    %v1471 = vmul.f32 %v430, %v1416
    %v1472 = vmul.f32 %v432, %v1420
    %v1473 = vmul.f32 %v436, %v1416
    %v1474 = vmul.f32 %v438, %v1420
    %v1475 = vmul.f32 %v440, %v1416
    %v1476 = vmul.f32 %v442, %v1420
    %v1477 = vmul.f32 %v446, %v1416
    %v1478 = vmul.f32 %v448, %v1420
    %v1479 = vmul.f32 %v450, %v1416
    %v1480 = vmul.f32 %v452, %v1420
    %v1481 = vmul.f32 %v456, %v1416
    %v1482 = vmul.f32 %v458, %v1420
    %v1483 = vmul.f32 %v460, %v1416
    %v1484 = vmul.f32 %v462, %v1420
    %v1485 = vsel %vm1349, %v1421, 0.0
    %v1486 = vsel %vm1350, %v1422, 0.0
    %v1487 = vsel %vm1351, %v1423, 0.0
    %v1488 = vsel %vm1352, %v1424, 0.0
    %v1489 = vsel %vm1353, %v1425, 0.0
    %v1490 = vsel %vm1354, %v1426, 0.0
    %v1491 = vsel %vm1355, %v1427, 0.0
    %v1492 = vsel %vm1356, %v1428, 0.0
    %v1493 = vsel %vm1357, %v1429, 0.0
    %v1494 = vsel %vm1358, %v1430, 0.0
    %v1495 = vsel %vm1359, %v1431, 0.0
    %v1496 = vsel %vm1360, %v1432, 0.0
    %v1497 = vsel %vm1361, %v1433, 0.0
    %v1498 = vsel %vm1362, %v1434, 0.0
    %v1499 = vsel %vm1363, %v1435, 0.0
    %v1500 = vsel %vm1364, %v1436, 0.0
    %v1501 = vsel %vm1365, %v1437, 0.0
    %v1502 = vsel %vm1366, %v1438, 0.0
    %v1503 = vsel %vm1367, %v1439, 0.0
    %v1504 = vsel %vm1368, %v1440, 0.0
    %v1505 = vsel %vm1369, %v1441, 0.0
    %v1506 = vsel %vm1370, %v1442, 0.0
    %v1507 = vsel %vm1371, %v1443, 0.0
    %v1508 = vsel %vm1372, %v1444, 0.0
    %v1509 = vsel %vm1373, %v1445, 0.0
    %v1510 = vsel %vm1374, %v1446, 0.0
    %v1511 = vsel %vm1375, %v1447, 0.0
    %v1512 = vsel %vm1376, %v1448, 0.0
    %v1513 = vsel %vm1377, %v1449, 0.0
    %v1514 = vsel %vm1378, %v1450, 0.0
    %v1515 = vsel %vm1379, %v1451, 0.0
    %v1516 = vsel %vm1380, %v1452, 0.0
    %v1517 = vsel %vm1381, %v1453, 0.0
    %v1518 = vsel %vm1382, %v1454, 0.0
    %v1519 = vsel %vm1383, %v1455, 0.0
    %v1520 = vsel %vm1384, %v1456, 0.0
    %v1521 = vsel %vm1385, %v1457, 0.0
    %v1522 = vsel %vm1386, %v1458, 0.0
    %v1523 = vsel %vm1387, %v1459, 0.0
    %v1524 = vsel %vm1388, %v1460, 0.0
    %v1525 = vsel %vm1389, %v1461, 0.0
    %v1526 = vsel %vm1390, %v1462, 0.0
    %v1527 = vsel %vm1391, %v1463, 0.0
    %v1528 = vsel %vm1392, %v1464, 0.0
    %v1529 = vsel %vm1393, %v1465, 0.0
    %v1530 = vsel %vm1394, %v1466, 0.0
    %v1531 = vsel %vm1395, %v1467, 0.0
    %v1532 = vsel %vm1396, %v1468, 0.0
    %v1533 = vsel %vm1397, %v1469, 0.0
    %v1534 = vsel %vm1398, %v1470, 0.0
    %v1535 = vsel %vm1399, %v1471, 0.0
    %v1536 = vsel %vm1400, %v1472, 0.0
    %v1537 = vsel %vm1401, %v1473, 0.0
    %v1538 = vsel %vm1402, %v1474, 0.0
    %v1539 = vsel %vm1403, %v1475, 0.0
    %v1540 = vsel %vm1404, %v1476, 0.0
    %v1541 = vsel %vm1405, %v1477, 0.0
    %v1542 = vsel %vm1406, %v1478, 0.0
    %v1543 = vsel %vm1407, %v1479, 0.0
    %v1544 = vsel %vm1408, %v1480, 0.0
    %v1545 = vsel %vm1409, %v1481, 0.0
    %v1546 = vsel %vm1410, %v1482, 0.0
    %v1547 = vsel %vm1411, %v1483, 0.0
    %v1548 = vsel %vm1412, %v1484, 0.0
    %v1549 = vadd.f32 %v1485, %v1486
    %1550 = vadd.xlane.f32.xlu0 %v1549
    %v1551 = vpop.xlane.xlu0 %1550
    %v1552 = vadd.f32 %v1487, %v1488
    %1553 = vadd.xlane.f32.xlu0 %v1552
    %v1554 = vpop.xlane.xlu0 %1553
    %v1555 = vadd.f32 %v1489, %v1490
    %1556 = vadd.xlane.f32.xlu0 %v1555
    %v1557 = vpop.xlane.xlu0 %1556
    %v1558 = vadd.f32 %v1491, %v1492
    %1559 = vadd.xlane.f32.xlu0 %v1558
    %v1560 = vpop.xlane.xlu0 %1559
    %v1561 = vadd.f32 %v1493, %v1494
    %1562 = vadd.xlane.f32.xlu0 %v1561
    %v1563 = vpop.xlane.xlu0 %1562
    %v1564 = vadd.f32 %v1495, %v1496
    %1565 = vadd.xlane.f32.xlu0 %v1564
    %v1566 = vpop.xlane.xlu0 %1565
    %v1567 = vadd.f32 %v1497, %v1498
    %1568 = vadd.xlane.f32.xlu0 %v1567
    %v1569 = vpop.xlane.xlu0 %1568
    %v1570 = vadd.f32 %v1499, %v1500
    %1571 = vadd.xlane.f32.xlu0 %v1570
    %v1572 = vpop.xlane.xlu0 %1571
    %v1573 = vadd.f32 %v1501, %v1502
    %1574 = vadd.xlane.f32.xlu0 %v1573
    %v1575 = vpop.xlane.xlu0 %1574
    %v1576 = vadd.f32 %v1503, %v1504
    %1577 = vadd.xlane.f32.xlu0 %v1576
    %v1578 = vpop.xlane.xlu0 %1577
    %v1579 = vadd.f32 %v1505, %v1506
    %1580 = vadd.xlane.f32.xlu0 %v1579
    %v1581 = vpop.xlane.xlu0 %1580
    %v1582 = vadd.f32 %v1507, %v1508
    %1583 = vadd.xlane.f32.xlu0 %v1582
    %v1584 = vpop.xlane.xlu0 %1583
    %v1585 = vadd.f32 %v1509, %v1510
    %1586 = vadd.xlane.f32.xlu0 %v1585
    %v1587 = vpop.xlane.xlu0 %1586
    %v1588 = vadd.f32 %v1511, %v1512
    %1589 = vadd.xlane.f32.xlu0 %v1588
    %v1590 = vpop.xlane.xlu0 %1589
    %v1591 = vadd.f32 %v1513, %v1514
    %1592 = vadd.xlane.f32.xlu0 %v1591
    %v1593 = vpop.xlane.xlu0 %1592
    %v1594 = vadd.f32 %v1515, %v1516
    %1595 = vadd.xlane.f32.xlu0 %v1594
    %v1596 = vpop.xlane.xlu0 %1595
    %v1597 = vadd.f32 %v1517, %v1518
    %1598 = vadd.xlane.f32.xlu0 %v1597
    %v1599 = vpop.xlane.xlu0 %1598
    %v1600 = vadd.f32 %v1519, %v1520
    %1601 = vadd.xlane.f32.xlu0 %v1600
    %v1602 = vpop.xlane.xlu0 %1601
    %v1603 = vadd.f32 %v1521, %v1522
    %1604 = vadd.xlane.f32.xlu0 %v1603
    %v1605 = vpop.xlane.xlu0 %1604
    %v1606 = vadd.f32 %v1523, %v1524
    %1607 = vadd.xlane.f32.xlu0 %v1606
    %v1608 = vpop.xlane.xlu0 %1607
    %v1609 = vadd.f32 %v1525, %v1526
    %1610 = vadd.xlane.f32.xlu0 %v1609
    %v1611 = vpop.xlane.xlu0 %1610
    %v1612 = vadd.f32 %v1527, %v1528
    %1613 = vadd.xlane.f32.xlu0 %v1612
    %v1614 = vpop.xlane.xlu0 %1613
    %v1615 = vadd.f32 %v1529, %v1530
    %1616 = vadd.xlane.f32.xlu0 %v1615
    %v1617 = vpop.xlane.xlu0 %1616
    %v1618 = vadd.f32 %v1531, %v1532
    %1619 = vadd.xlane.f32.xlu0 %v1618
    %v1620 = vpop.xlane.xlu0 %1619
    %v1621 = vadd.f32 %v1533, %v1534
    %1622 = vadd.xlane.f32.xlu0 %v1621
    %v1623 = vpop.xlane.xlu0 %1622
    %v1624 = vadd.f32 %v1535, %v1536
    %1625 = vadd.xlane.f32.xlu0 %v1624
    %v1626 = vpop.xlane.xlu0 %1625
    %v1627 = vadd.f32 %v1537, %v1538
    %1628 = vadd.xlane.f32.xlu0 %v1627
    %v1629 = vpop.xlane.xlu0 %1628
    %v1630 = vadd.f32 %v1539, %v1540
    %1631 = vadd.xlane.f32.xlu0 %v1630
    %v1632 = vpop.xlane.xlu0 %1631
    %v1633 = vadd.f32 %v1541, %v1542
    %1634 = vadd.xlane.f32.xlu0 %v1633
    %v1635 = vpop.xlane.xlu0 %1634
    %v1636 = vadd.f32 %v1543, %v1544
    %1637 = vadd.xlane.f32.xlu0 %v1636
    %v1638 = vpop.xlane.xlu0 %1637
    %v1639 = vadd.f32 %v1545, %v1546
    %1640 = vadd.xlane.f32.xlu0 %v1639
    %v1641 = vpop.xlane.xlu0 %1640
    %v1642 = vadd.f32 %v1547, %v1548
    %1643 = vadd.xlane.f32.xlu0 %v1642
    %v1644 = vpop.xlane.xlu0 %1643
    %v1645 = vld [vmem:[#allocation2] sm:$0xff]
    %v1646 = vld [vmem:[#allocation2 + $0x8] sm:$0xff]
    %v1647 = vld [vmem:[#allocation2 + $0x10] sm:$0xff]
    %v1648 = vld [vmem:[#allocation2 + $0x18] sm:$0xff]
    %v1649 = vld [vmem:[#allocation2 + $0x20] sm:$0xff]
    %v1650 = vld [vmem:[#allocation2 + $0x28] sm:$0xff]
    %v1651 = vld [vmem:[#allocation2 + $0x30] sm:$0xff]
    %v1652 = vld [vmem:[#allocation2 + $0x38] sm:$0xff]
    %v1653 = vld [vmem:[#allocation2 + $0x40] sm:$0xff]
    %v1654 = vld [vmem:[#allocation2 + $0x48] sm:$0xff]
    %v1655 = vld [vmem:[#allocation2 + $0x50] sm:$0xff]
    %v1656 = vld [vmem:[#allocation2 + $0x58] sm:$0xff]
    %v1657 = vld [vmem:[#allocation2 + $0x60] sm:$0xff]
    %v1658 = vld [vmem:[#allocation2 + $0x68] sm:$0xff]
    %v1659 = vld [vmem:[#allocation2 + $0x70] sm:$0xff]
    %v1660 = vld [vmem:[#allocation2 + $0x78] sm:$0xff]
    %v1661 = vld [vmem:[#allocation2 + $0x80] sm:$0xff]
    %v1662 = vld [vmem:[#allocation2 + $0x88] sm:$0xff]
    %v1663 = vld [vmem:[#allocation2 + $0x90] sm:$0xff]
    %v1664 = vld [vmem:[#allocation2 + $0x98] sm:$0xff]
    %v1665 = vld [vmem:[#allocation2 + $0xa0] sm:$0xff]
    %v1666 = vld [vmem:[#allocation2 + $0xa8] sm:$0xff]
    %v1667 = vld [vmem:[#allocation2 + $0xb0] sm:$0xff]
    %v1668 = vld [vmem:[#allocation2 + $0xb8] sm:$0xff]
    %v1669 = vld [vmem:[#allocation2 + $0xc0] sm:$0xff]
    %v1670 = vld [vmem:[#allocation2 + $0xc8] sm:$0xff]
    %v1671 = vld [vmem:[#allocation2 + $0xd0] sm:$0xff]
    %v1672 = vld [vmem:[#allocation2 + $0xd8] sm:$0xff]
    %v1673 = vld [vmem:[#allocation2 + $0xe0] sm:$0xff]
    %v1674 = vld [vmem:[#allocation2 + $0xe8] sm:$0xff]
    %v1675 = vld [vmem:[#allocation2 + $0xf0] sm:$0xff]
    %v1676 = vld [vmem:[#allocation2 + $0xf8] sm:$0xff]
    %vm1677 = vcmp.gt.f32.partialorder %v615, %v1645
    %vm1678 = vcmp.gt.f32.partialorder %v618, %v1646
    %vm1679 = vcmp.gt.f32.partialorder %v621, %v1647
    %vm1680 = vcmp.gt.f32.partialorder %v624, %v1648
    %vm1681 = vcmp.gt.f32.partialorder %v627, %v1649
    %vm1682 = vcmp.gt.f32.partialorder %v630, %v1650
    %vm1683 = vcmp.gt.f32.partialorder %v633, %v1651
    %vm1684 = vcmp.gt.f32.partialorder %v636, %v1652
    %vm1685 = vcmp.gt.f32.partialorder %v639, %v1653
    %vm1686 = vcmp.gt.f32.partialorder %v642, %v1654
    %vm1687 = vcmp.gt.f32.partialorder %v645, %v1655
    %vm1688 = vcmp.gt.f32.partialorder %v648, %v1656
    %vm1689 = vcmp.gt.f32.partialorder %v651, %v1657
    %vm1690 = vcmp.gt.f32.partialorder %v654, %v1658
    %vm1691 = vcmp.gt.f32.partialorder %v657, %v1659
    %vm1692 = vcmp.gt.f32.partialorder %v660, %v1660
    %vm1693 = vcmp.gt.f32.partialorder %v663, %v1661
    %vm1694 = vcmp.gt.f32.partialorder %v666, %v1662
    %vm1695 = vcmp.gt.f32.partialorder %v669, %v1663
    %vm1696 = vcmp.gt.f32.partialorder %v672, %v1664
    %vm1697 = vcmp.gt.f32.partialorder %v675, %v1665
    %vm1698 = vcmp.gt.f32.partialorder %v678, %v1666
    %vm1699 = vcmp.gt.f32.partialorder %v681, %v1667
    %vm1700 = vcmp.gt.f32.partialorder %v684, %v1668
    %vm1701 = vcmp.gt.f32.partialorder %v687, %v1669
    %vm1702 = vcmp.gt.f32.partialorder %v690, %v1670
    %vm1703 = vcmp.gt.f32.partialorder %v693, %v1671
    %vm1704 = vcmp.gt.f32.partialorder %v696, %v1672
    %vm1705 = vcmp.gt.f32.partialorder %v699, %v1673
    %vm1706 = vcmp.gt.f32.partialorder %v702, %v1674
    %vm1707 = vcmp.gt.f32.partialorder %v705, %v1675
    %vm1708 = vcmp.gt.f32.partialorder %v708, %v1676
    %v1709 = vsel %vm1677, %v615, %v1645
    %v1710 = vsel %vm1678, %v618, %v1646
    %v1711 = vsel %vm1679, %v621, %v1647
    %v1712 = vsel %vm1680, %v624, %v1648
    %v1713 = vsel %vm1681, %v627, %v1649
    %v1714 = vsel %vm1682, %v630, %v1650
    %v1715 = vsel %vm1683, %v633, %v1651
    %v1716 = vsel %vm1684, %v636, %v1652
    %v1717 = vsel %vm1685, %v639, %v1653
    %v1718 = vsel %vm1686, %v642, %v1654
    %v1719 = vsel %vm1687, %v645, %v1655
    %v1720 = vsel %vm1688, %v648, %v1656
    %v1721 = vsel %vm1689, %v651, %v1657
    %v1722 = vsel %vm1690, %v654, %v1658
    %v1723 = vsel %vm1691, %v657, %v1659
    %v1724 = vsel %vm1692, %v660, %v1660
    %v1725 = vsel %vm1693, %v663, %v1661
    %v1726 = vsel %vm1694, %v666, %v1662
    %v1727 = vsel %vm1695, %v669, %v1663
    %v1728 = vsel %vm1696, %v672, %v1664
    %v1729 = vsel %vm1697, %v675, %v1665
    %v1730 = vsel %vm1698, %v678, %v1666
    %v1731 = vsel %vm1699, %v681, %v1667
    %v1732 = vsel %vm1700, %v684, %v1668
    %v1733 = vsel %vm1701, %v687, %v1669
    %v1734 = vsel %vm1702, %v690, %v1670
    %v1735 = vsel %vm1703, %v693, %v1671
    %v1736 = vsel %vm1704, %v696, %v1672
    %v1737 = vsel %vm1705, %v699, %v1673
    %v1738 = vsel %vm1706, %v702, %v1674
    %v1739 = vsel %vm1707, %v705, %v1675
    %v1740 = vsel %vm1708, %v708, %v1676
    %vm1741 = vcmask 7168
    %1742 = vst.msk [vmem:[#allocation2] sm:$0xff] %vm1741, %v1709
    %1743 = vst.msk [vmem:[#allocation2 + $0x8] sm:$0xff] %vm1741, %v1710
    %1744 = vst.msk [vmem:[#allocation2 + $0x10] sm:$0xff] %vm1741, %v1711
    %1745 = vst.msk [vmem:[#allocation2 + $0x18] sm:$0xff] %vm1741, %v1712
    %1746 = vst.msk [vmem:[#allocation2 + $0x20] sm:$0xff] %vm1741, %v1713
    %1747 = vst.msk [vmem:[#allocation2 + $0x28] sm:$0xff] %vm1741, %v1714
    %1748 = vst.msk [vmem:[#allocation2 + $0x30] sm:$0xff] %vm1741, %v1715
    %1749 = vst.msk [vmem:[#allocation2 + $0x38] sm:$0xff] %vm1741, %v1716
    %1750 = vst.msk [vmem:[#allocation2 + $0x40] sm:$0xff] %vm1741, %v1717
    %1751 = vst.msk [vmem:[#allocation2 + $0x48] sm:$0xff] %vm1741, %v1718
    %1752 = vst.msk [vmem:[#allocation2 + $0x50] sm:$0xff] %vm1741, %v1719
    %1753 = vst.msk [vmem:[#allocation2 + $0x58] sm:$0xff] %vm1741, %v1720
    %1754 = vst.msk [vmem:[#allocation2 + $0x60] sm:$0xff] %vm1741, %v1721
    %1755 = vst.msk [vmem:[#allocation2 + $0x68] sm:$0xff] %vm1741, %v1722
    %1756 = vst.msk [vmem:[#allocation2 + $0x70] sm:$0xff] %vm1741, %v1723
    %1757 = vst.msk [vmem:[#allocation2 + $0x78] sm:$0xff] %vm1741, %v1724
    %1758 = vst.msk [vmem:[#allocation2 + $0x80] sm:$0xff] %vm1741, %v1725
    %1759 = vst.msk [vmem:[#allocation2 + $0x88] sm:$0xff] %vm1741, %v1726
    %1760 = vst.msk [vmem:[#allocation2 + $0x90] sm:$0xff] %vm1741, %v1727
    %1761 = vst.msk [vmem:[#allocation2 + $0x98] sm:$0xff] %vm1741, %v1728
    %1762 = vst.msk [vmem:[#allocation2 + $0xa0] sm:$0xff] %vm1741, %v1729
    %1763 = vst.msk [vmem:[#allocation2 + $0xa8] sm:$0xff] %vm1741, %v1730
    %1764 = vst.msk [vmem:[#allocation2 + $0xb0] sm:$0xff] %vm1741, %v1731
    %1765 = vst.msk [vmem:[#allocation2 + $0xb8] sm:$0xff] %vm1741, %v1732
    %1766 = vst.msk [vmem:[#allocation2 + $0xc0] sm:$0xff] %vm1741, %v1733
    %1767 = vst.msk [vmem:[#allocation2 + $0xc8] sm:$0xff] %vm1741, %v1734
    %1768 = vst.msk [vmem:[#allocation2 + $0xd0] sm:$0xff] %vm1741, %v1735
    %1769 = vst.msk [vmem:[#allocation2 + $0xd8] sm:$0xff] %vm1741, %v1736
    %1770 = vst.msk [vmem:[#allocation2 + $0xe0] sm:$0xff] %vm1741, %v1737
    %1771 = vst.msk [vmem:[#allocation2 + $0xe8] sm:$0xff] %vm1741, %v1738
    %1772 = vst.msk [vmem:[#allocation2 + $0xf0] sm:$0xff] %vm1741, %v1739
    %1773 = vst.msk [vmem:[#allocation2 + $0xf8] sm:$0xff] %vm1741, %v1740
    %v1774 = vld [vmem:[#allocation3] sm:$0xff]
    %v1775 = vld [vmem:[#allocation3 + $0x8] sm:$0xff]
    %v1776 = vld [vmem:[#allocation3 + $0x10] sm:$0xff]
    %v1777 = vld [vmem:[#allocation3 + $0x18] sm:$0xff]
    %v1778 = vld [vmem:[#allocation3 + $0x20] sm:$0xff]
    %v1779 = vld [vmem:[#allocation3 + $0x28] sm:$0xff]
    %v1780 = vld [vmem:[#allocation3 + $0x30] sm:$0xff]
    %v1781 = vld [vmem:[#allocation3 + $0x38] sm:$0xff]
    %v1782 = vld [vmem:[#allocation3 + $0x40] sm:$0xff]
    %v1783 = vld [vmem:[#allocation3 + $0x48] sm:$0xff]
    %v1784 = vld [vmem:[#allocation3 + $0x50] sm:$0xff]
    %v1785 = vld [vmem:[#allocation3 + $0x58] sm:$0xff]
    %v1786 = vld [vmem:[#allocation3 + $0x60] sm:$0xff]
    %v1787 = vld [vmem:[#allocation3 + $0x68] sm:$0xff]
    %v1788 = vld [vmem:[#allocation3 + $0x70] sm:$0xff]
    %v1789 = vld [vmem:[#allocation3 + $0x78] sm:$0xff]
    %v1790 = vld [vmem:[#allocation3 + $0x80] sm:$0xff]
    %v1791 = vld [vmem:[#allocation3 + $0x88] sm:$0xff]
    %v1792 = vld [vmem:[#allocation3 + $0x90] sm:$0xff]
    %v1793 = vld [vmem:[#allocation3 + $0x98] sm:$0xff]
    %v1794 = vld [vmem:[#allocation3 + $0xa0] sm:$0xff]
    %v1795 = vld [vmem:[#allocation3 + $0xa8] sm:$0xff]
    %v1796 = vld [vmem:[#allocation3 + $0xb0] sm:$0xff]
    %v1797 = vld [vmem:[#allocation3 + $0xb8] sm:$0xff]
    %v1798 = vld [vmem:[#allocation3 + $0xc0] sm:$0xff]
    %v1799 = vld [vmem:[#allocation3 + $0xc8] sm:$0xff]
    %v1800 = vld [vmem:[#allocation3 + $0xd0] sm:$0xff]
    %v1801 = vld [vmem:[#allocation3 + $0xd8] sm:$0xff]
    %v1802 = vld [vmem:[#allocation3 + $0xe0] sm:$0xff]
    %v1803 = vld [vmem:[#allocation3 + $0xe8] sm:$0xff]
    %v1804 = vld [vmem:[#allocation3 + $0xf0] sm:$0xff]
    %v1805 = vld [vmem:[#allocation3 + $0xf8] sm:$0xff]
    %v1806 = vsel %vm1677, %v1551, %v1774
    %v1807 = vsel %vm1678, %v1554, %v1775
    %v1808 = vsel %vm1679, %v1557, %v1776
    %v1809 = vsel %vm1680, %v1560, %v1777
    %v1810 = vsel %vm1681, %v1563, %v1778
    %v1811 = vsel %vm1682, %v1566, %v1779
    %v1812 = vsel %vm1683, %v1569, %v1780
    %v1813 = vsel %vm1684, %v1572, %v1781
    %v1814 = vsel %vm1685, %v1575, %v1782
    %v1815 = vsel %vm1686, %v1578, %v1783
    %v1816 = vsel %vm1687, %v1581, %v1784
    %v1817 = vsel %vm1688, %v1584, %v1785
    %v1818 = vsel %vm1689, %v1587, %v1786
    %v1819 = vsel %vm1690, %v1590, %v1787
    %v1820 = vsel %vm1691, %v1593, %v1788
    %v1821 = vsel %vm1692, %v1596, %v1789
    %v1822 = vsel %vm1693, %v1599, %v1790
    %v1823 = vsel %vm1694, %v1602, %v1791
    %v1824 = vsel %vm1695, %v1605, %v1792
    %v1825 = vsel %vm1696, %v1608, %v1793
    %v1826 = vsel %vm1697, %v1611, %v1794
    %v1827 = vsel %vm1698, %v1614, %v1795
    %v1828 = vsel %vm1699, %v1617, %v1796
    %v1829 = vsel %vm1700, %v1620, %v1797
    %v1830 = vsel %vm1701, %v1623, %v1798
    %v1831 = vsel %vm1702, %v1626, %v1799
    %v1832 = vsel %vm1703, %v1629, %v1800
    %v1833 = vsel %vm1704, %v1632, %v1801
    %v1834 = vsel %vm1705, %v1635, %v1802
    %v1835 = vsel %vm1706, %v1638, %v1803
    %v1836 = vsel %vm1707, %v1641, %v1804
    %v1837 = vsel %vm1708, %v1644, %v1805
    %1838 = vst.msk [vmem:[#allocation3] sm:$0xff] %vm1741, %v1806
    %1839 = vst.msk [vmem:[#allocation3 + $0x8] sm:$0xff] %vm1741, %v1807
    %1840 = vst.msk [vmem:[#allocation3 + $0x10] sm:$0xff] %vm1741, %v1808
    %1841 = vst.msk [vmem:[#allocation3 + $0x18] sm:$0xff] %vm1741, %v1809
    %1842 = vst.msk [vmem:[#allocation3 + $0x20] sm:$0xff] %vm1741, %v1810
    %1843 = vst.msk [vmem:[#allocation3 + $0x28] sm:$0xff] %vm1741, %v1811
    %1844 = vst.msk [vmem:[#allocation3 + $0x30] sm:$0xff] %vm1741, %v1812
    %1845 = vst.msk [vmem:[#allocation3 + $0x38] sm:$0xff] %vm1741, %v1813
    %1846 = vst.msk [vmem:[#allocation3 + $0x40] sm:$0xff] %vm1741, %v1814
    %1847 = vst.msk [vmem:[#allocation3 + $0x48] sm:$0xff] %vm1741, %v1815
    %1848 = vst.msk [vmem:[#allocation3 + $0x50] sm:$0xff] %vm1741, %v1816
    %1849 = vst.msk [vmem:[#allocation3 + $0x58] sm:$0xff] %vm1741, %v1817
    %1850 = vst.msk [vmem:[#allocation3 + $0x60] sm:$0xff] %vm1741, %v1818
    %1851 = vst.msk [vmem:[#allocation3 + $0x68] sm:$0xff] %vm1741, %v1819
    %1852 = vst.msk [vmem:[#allocation3 + $0x70] sm:$0xff] %vm1741, %v1820
    %1853 = vst.msk [vmem:[#allocation3 + $0x78] sm:$0xff] %vm1741, %v1821
    %1854 = vst.msk [vmem:[#allocation3 + $0x80] sm:$0xff] %vm1741, %v1822
    %1855 = vst.msk [vmem:[#allocation3 + $0x88] sm:$0xff] %vm1741, %v1823
    %1856 = vst.msk [vmem:[#allocation3 + $0x90] sm:$0xff] %vm1741, %v1824
    %1857 = vst.msk [vmem:[#allocation3 + $0x98] sm:$0xff] %vm1741, %v1825
    %1858 = vst.msk [vmem:[#allocation3 + $0xa0] sm:$0xff] %vm1741, %v1826
    %1859 = vst.msk [vmem:[#allocation3 + $0xa8] sm:$0xff] %vm1741, %v1827
    %1860 = vst.msk [vmem:[#allocation3 + $0xb0] sm:$0xff] %vm1741, %v1828
    %1861 = vst.msk [vmem:[#allocation3 + $0xb8] sm:$0xff] %vm1741, %v1829
    %1862 = vst.msk [vmem:[#allocation3 + $0xc0] sm:$0xff] %vm1741, %v1830
    %1863 = vst.msk [vmem:[#allocation3 + $0xc8] sm:$0xff] %vm1741, %v1831
    %1864 = vst.msk [vmem:[#allocation3 + $0xd0] sm:$0xff] %vm1741, %v1832
    %1865 = vst.msk [vmem:[#allocation3 + $0xd8] sm:$0xff] %vm1741, %v1833
    %1866 = vst.msk [vmem:[#allocation3 + $0xe0] sm:$0xff] %vm1741, %v1834
    %1867 = vst.msk [vmem:[#allocation3 + $0xe8] sm:$0xff] %vm1741, %v1835
    %1868 = vst.msk [vmem:[#allocation3 + $0xf0] sm:$0xff] %vm1741, %v1836
    %1869 = vst.msk [vmem:[#allocation3 + $0xf8] sm:$0xff] %vm1741, %v1837
    // Predicated region
    $region18: #{tpu_custom_call.1} parent=1 // pred_check
      %p1870 = pneg %p17
    $region19: #{tpu_custom_call.1} parent=1 // pred_check_branch
      %1872 = sbr.rel (%p1870) target = $region21
    $region20: #{tpu_custom_call.1} parent=1 // pred_region
      %v1873 = vlaneseq
      %v1874 = vshrl.u32 %v1873, 7
      %v1875 = vadd.s32 %v1874, 8
      %v1876 = vadd.s32 %v1874, 16
      %v1877 = vadd.s32 %v1874, 24
      %v1878 = vadd.s32 %v1874, 32
      %v1879 = vadd.s32 %v1874, 40
      %v1880 = vadd.s32 %v1874, 48
      %v1881 = vadd.s32 %v1874, 56
      %v1882 = vadd.s32 %v1874, 64
      %v1883 = vadd.s32 %v1874, 72
      %v1884 = vadd.s32 %v1874, 80
      %v1885 = vadd.s32 %v1874, 88
      %v1886 = vadd.s32 %v1874, 96
      %v1887 = vadd.s32 %v1874, 104
      %v1888 = vadd.s32 %v1874, 112
      %v1889 = vadd.s32 %v1874, 120
      %v1890 = vadd.s32 %v1874, 128
      %v1891 = vadd.s32 %v1874, 136
      %v1892 = vadd.s32 %v1874, 144
      %v1893 = vadd.s32 %v1874, 152
      %v1894 = vadd.s32 %v1874, 160
      %v1895 = vadd.s32 %v1874, 168
      %v1896 = vadd.s32 %v1874, 176
      %v1897 = vadd.s32 %v1874, 184
      %v1898 = vadd.s32 %v1874, 192
      %v1899 = vadd.s32 %v1874, 200
      %v1900 = vadd.s32 %v1874, 208
      %v1901 = vadd.s32 %v1874, 216
      %v1902 = vadd.s32 %v1874, 224
      %v1903 = vadd.s32 %v1874, 232
      %v1904 = vadd.s32 %v1874, 240
      %v1905 = vadd.s32 %v1874, 248
      %v1906 = vstv %s16
      %v1907 = vadd.s32 %v1874, %v1906
      %v1908 = vadd.s32 %v1875, %v1906
      %v1909 = vadd.s32 %v1876, %v1906
      %v1910 = vadd.s32 %v1877, %v1906
      %v1911 = vadd.s32 %v1878, %v1906
      %v1912 = vadd.s32 %v1879, %v1906
      %v1913 = vadd.s32 %v1880, %v1906
      %v1914 = vadd.s32 %v1881, %v1906
      %v1915 = vadd.s32 %v1882, %v1906
      %v1916 = vadd.s32 %v1883, %v1906
      %v1917 = vadd.s32 %v1884, %v1906
      %v1918 = vadd.s32 %v1885, %v1906
      %v1919 = vadd.s32 %v1886, %v1906
      %v1920 = vadd.s32 %v1887, %v1906
      %v1921 = vadd.s32 %v1888, %v1906
      %v1922 = vadd.s32 %v1889, %v1906
      %v1923 = vadd.s32 %v1890, %v1906
      %v1924 = vadd.s32 %v1891, %v1906
      %v1925 = vadd.s32 %v1892, %v1906
      %v1926 = vadd.s32 %v1893, %v1906
      %v1927 = vadd.s32 %v1894, %v1906
      %v1928 = vadd.s32 %v1895, %v1906
      %v1929 = vadd.s32 %v1896, %v1906
      %v1930 = vadd.s32 %v1897, %v1906
      %v1931 = vadd.s32 %v1898, %v1906
      %v1932 = vadd.s32 %v1899, %v1906
      %v1933 = vadd.s32 %v1900, %v1906
      %v1934 = vadd.s32 %v1901, %v1906
      %v1935 = vadd.s32 %v1902, %v1906
      %v1936 = vadd.s32 %v1903, %v1906
      %v1937 = vadd.s32 %v1904, %v1906
      %v1938 = vadd.s32 %v1905, %v1906
      %vm1939 = vcmp.lt.s32.totalorder %v1907, 256
      %vm1940 = vcmp.lt.s32.totalorder %v1908, 256
      %vm1941 = vcmp.lt.s32.totalorder %v1909, 256
      %vm1942 = vcmp.lt.s32.totalorder %v1910, 256
      %vm1943 = vcmp.lt.s32.totalorder %v1911, 256
      %vm1944 = vcmp.lt.s32.totalorder %v1912, 256
      %vm1945 = vcmp.lt.s32.totalorder %v1913, 256
      %vm1946 = vcmp.lt.s32.totalorder %v1914, 256
      %vm1947 = vcmp.lt.s32.totalorder %v1915, 256
      %vm1948 = vcmp.lt.s32.totalorder %v1916, 256
      %vm1949 = vcmp.lt.s32.totalorder %v1917, 256
      %vm1950 = vcmp.lt.s32.totalorder %v1918, 256
      %vm1951 = vcmp.lt.s32.totalorder %v1919, 256
      %vm1952 = vcmp.lt.s32.totalorder %v1920, 256
      %vm1953 = vcmp.lt.s32.totalorder %v1921, 256
      %vm1954 = vcmp.lt.s32.totalorder %v1922, 256
      %vm1955 = vcmp.lt.s32.totalorder %v1923, 256
      %vm1956 = vcmp.lt.s32.totalorder %v1924, 256
      %vm1957 = vcmp.lt.s32.totalorder %v1925, 256
      %vm1958 = vcmp.lt.s32.totalorder %v1926, 256
      %vm1959 = vcmp.lt.s32.totalorder %v1927, 256
      %vm1960 = vcmp.lt.s32.totalorder %v1928, 256
      %vm1961 = vcmp.lt.s32.totalorder %v1929, 256
      %vm1962 = vcmp.lt.s32.totalorder %v1930, 256
      %vm1963 = vcmp.lt.s32.totalorder %v1931, 256
      %vm1964 = vcmp.lt.s32.totalorder %v1932, 256
      %vm1965 = vcmp.lt.s32.totalorder %v1933, 256
      %vm1966 = vcmp.lt.s32.totalorder %v1934, 256
      %vm1967 = vcmp.lt.s32.totalorder %v1935, 256
      %vm1968 = vcmp.lt.s32.totalorder %v1936, 256
      %vm1969 = vcmp.lt.s32.totalorder %v1937, 256
      %vm1970 = vcmp.lt.s32.totalorder %v1938, 256
      %v1971 = vld [vmem:[#allocation3] sm:$0xff]
      %v1972 = vld [vmem:[#allocation3 + $0x8] sm:$0xff]
      %v1973 = vld [vmem:[#allocation3 + $0x10] sm:$0xff]
      %v1974 = vld [vmem:[#allocation3 + $0x18] sm:$0xff]
      %v1975 = vld [vmem:[#allocation3 + $0x20] sm:$0xff]
      %v1976 = vld [vmem:[#allocation3 + $0x28] sm:$0xff]
      %v1977 = vld [vmem:[#allocation3 + $0x30] sm:$0xff]
      %v1978 = vld [vmem:[#allocation3 + $0x38] sm:$0xff]
      %v1979 = vld [vmem:[#allocation3 + $0x40] sm:$0xff]
      %v1980 = vld [vmem:[#allocation3 + $0x48] sm:$0xff]
      %v1981 = vld [vmem:[#allocation3 + $0x50] sm:$0xff]
      %v1982 = vld [vmem:[#allocation3 + $0x58] sm:$0xff]
      %v1983 = vld [vmem:[#allocation3 + $0x60] sm:$0xff]
      %v1984 = vld [vmem:[#allocation3 + $0x68] sm:$0xff]
      %v1985 = vld [vmem:[#allocation3 + $0x70] sm:$0xff]
      %v1986 = vld [vmem:[#allocation3 + $0x78] sm:$0xff]
      %v1987 = vld [vmem:[#allocation3 + $0x80] sm:$0xff]
      %v1988 = vld [vmem:[#allocation3 + $0x88] sm:$0xff]
      %v1989 = vld [vmem:[#allocation3 + $0x90] sm:$0xff]
      %v1990 = vld [vmem:[#allocation3 + $0x98] sm:$0xff]
      %v1991 = vld [vmem:[#allocation3 + $0xa0] sm:$0xff]
      %v1992 = vld [vmem:[#allocation3 + $0xa8] sm:$0xff]
      %v1993 = vld [vmem:[#allocation3 + $0xb0] sm:$0xff]
      %v1994 = vld [vmem:[#allocation3 + $0xb8] sm:$0xff]
      %v1995 = vld [vmem:[#allocation3 + $0xc0] sm:$0xff]
      %v1996 = vld [vmem:[#allocation3 + $0xc8] sm:$0xff]
      %v1997 = vld [vmem:[#allocation3 + $0xd0] sm:$0xff]
      %v1998 = vld [vmem:[#allocation3 + $0xd8] sm:$0xff]
      %v1999 = vld [vmem:[#allocation3 + $0xe0] sm:$0xff]
      %v2000 = vld [vmem:[#allocation3 + $0xe8] sm:$0xff]
      %v2001 = vld [vmem:[#allocation3 + $0xf0] sm:$0xff]
      %v2002 = vld [vmem:[#allocation3 + $0xf8] sm:$0xff]
      %v2003 = vsub.f32 1.0, %v1971
      %v2004 = vsub.f32 1.0, %v1972
      %v2005 = vsub.f32 1.0, %v1973
      %v2006 = vsub.f32 1.0, %v1974
      %v2007 = vsub.f32 1.0, %v1975
      %v2008 = vsub.f32 1.0, %v1976
      %v2009 = vsub.f32 1.0, %v1977
      %v2010 = vsub.f32 1.0, %v1978
      %v2011 = vsub.f32 1.0, %v1979
      %v2012 = vsub.f32 1.0, %v1980
      %v2013 = vsub.f32 1.0, %v1981
      %v2014 = vsub.f32 1.0, %v1982
      %v2015 = vsub.f32 1.0, %v1983
      %v2016 = vsub.f32 1.0, %v1984
      %v2017 = vsub.f32 1.0, %v1985
      %v2018 = vsub.f32 1.0, %v1986
      %v2019 = vsub.f32 1.0, %v1987
      %v2020 = vsub.f32 1.0, %v1988
      %v2021 = vsub.f32 1.0, %v1989
      %v2022 = vsub.f32 1.0, %v1990
      %v2023 = vsub.f32 1.0, %v1991
      %v2024 = vsub.f32 1.0, %v1992
      %v2025 = vsub.f32 1.0, %v1993
      %v2026 = vsub.f32 1.0, %v1994
      %v2027 = vsub.f32 1.0, %v1995
      %v2028 = vsub.f32 1.0, %v1996
      %v2029 = vsub.f32 1.0, %v1997
      %v2030 = vsub.f32 1.0, %v1998
      %v2031 = vsub.f32 1.0, %v1999
      %v2032 = vsub.f32 1.0, %v2000
      %v2033 = vsub.f32 1.0, %v2001
      %v2034 = vsub.f32 1.0, %v2002
      %v2035 = vsel %vm1939, %v2003, 0.0
      %v2036 = vsel %vm1940, %v2004, 0.0
      %v2037 = vsel %vm1941, %v2005, 0.0
      %v2038 = vsel %vm1942, %v2006, 0.0
      %v2039 = vsel %vm1943, %v2007, 0.0
      %v2040 = vsel %vm1944, %v2008, 0.0
      %v2041 = vsel %vm1945, %v2009, 0.0
      %v2042 = vsel %vm1946, %v2010, 0.0
      %v2043 = vsel %vm1947, %v2011, 0.0
      %v2044 = vsel %vm1948, %v2012, 0.0
      %v2045 = vsel %vm1949, %v2013, 0.0
      %v2046 = vsel %vm1950, %v2014, 0.0
      %v2047 = vsel %vm1951, %v2015, 0.0
      %v2048 = vsel %vm1952, %v2016, 0.0
      %v2049 = vsel %vm1953, %v2017, 0.0
      %v2050 = vsel %vm1954, %v2018, 0.0
      %v2051 = vsel %vm1955, %v2019, 0.0
      %v2052 = vsel %vm1956, %v2020, 0.0
      %v2053 = vsel %vm1957, %v2021, 0.0
      %v2054 = vsel %vm1958, %v2022, 0.0
      %v2055 = vsel %vm1959, %v2023, 0.0
      %v2056 = vsel %vm1960, %v2024, 0.0
      %v2057 = vsel %vm1961, %v2025, 0.0
      %v2058 = vsel %vm1962, %v2026, 0.0
      %v2059 = vsel %vm1963, %v2027, 0.0
      %v2060 = vsel %vm1964, %v2028, 0.0
      %v2061 = vsel %vm1965, %v2029, 0.0
      %v2062 = vsel %vm1966, %v2030, 0.0
      %v2063 = vsel %vm1967, %v2031, 0.0
      %v2064 = vsel %vm1968, %v2032, 0.0
      %v2065 = vsel %vm1969, %v2033, 0.0
      %v2066 = vsel %vm1970, %v2034, 0.0
      %v2067 = vsel %vm1741, %v2035, 0.0
      %v2068 = vsel %vm1741, %v2036, 0.0
      %v2069 = vadd.f32 %v2067, %v2068
      %v2070 = vsel %vm1741, %v2037, 0.0
      %v2071 = vadd.f32 %v2069, %v2070
      %v2072 = vsel %vm1741, %v2038, 0.0
      %v2073 = vadd.f32 %v2071, %v2072
      %v2074 = vsel %vm1741, %v2039, 0.0
      %v2075 = vadd.f32 %v2073, %v2074
      %v2076 = vsel %vm1741, %v2040, 0.0
      %v2077 = vadd.f32 %v2075, %v2076
      %v2078 = vsel %vm1741, %v2041, 0.0
      %v2079 = vadd.f32 %v2077, %v2078
      %v2080 = vsel %vm1741, %v2042, 0.0
      %v2081 = vadd.f32 %v2079, %v2080
      %v2082 = vsel %vm1741, %v2043, 0.0
      %v2083 = vadd.f32 %v2081, %v2082
      %v2084 = vsel %vm1741, %v2044, 0.0
      %v2085 = vadd.f32 %v2083, %v2084
      %v2086 = vsel %vm1741, %v2045, 0.0
      %v2087 = vadd.f32 %v2085, %v2086
      %v2088 = vsel %vm1741, %v2046, 0.0
      %v2089 = vadd.f32 %v2087, %v2088
      %v2090 = vsel %vm1741, %v2047, 0.0
      %v2091 = vadd.f32 %v2089, %v2090
      %v2092 = vsel %vm1741, %v2048, 0.0
      %v2093 = vadd.f32 %v2091, %v2092
      %v2094 = vsel %vm1741, %v2049, 0.0
      %v2095 = vadd.f32 %v2093, %v2094
      %v2096 = vsel %vm1741, %v2050, 0.0
      %v2097 = vadd.f32 %v2095, %v2096
      %v2098 = vsel %vm1741, %v2051, 0.0
      %v2099 = vadd.f32 %v2097, %v2098
      %v2100 = vsel %vm1741, %v2052, 0.0
      %v2101 = vadd.f32 %v2099, %v2100
      %v2102 = vsel %vm1741, %v2053, 0.0
      %v2103 = vadd.f32 %v2101, %v2102
      %v2104 = vsel %vm1741, %v2054, 0.0
      %v2105 = vadd.f32 %v2103, %v2104
      %v2106 = vsel %vm1741, %v2055, 0.0
      %v2107 = vadd.f32 %v2105, %v2106
      %v2108 = vsel %vm1741, %v2056, 0.0
      %v2109 = vadd.f32 %v2107, %v2108
      %v2110 = vsel %vm1741, %v2057, 0.0
      %v2111 = vadd.f32 %v2109, %v2110
      %v2112 = vsel %vm1741, %v2058, 0.0
      %v2113 = vadd.f32 %v2111, %v2112
      %v2114 = vsel %vm1741, %v2059, 0.0
      %v2115 = vadd.f32 %v2113, %v2114
      %v2116 = vsel %vm1741, %v2060, 0.0
      %v2117 = vadd.f32 %v2115, %v2116
      %v2118 = vsel %vm1741, %v2061, 0.0
      %v2119 = vadd.f32 %v2117, %v2118
      %v2120 = vsel %vm1741, %v2062, 0.0
      %v2121 = vadd.f32 %v2119, %v2120
      %v2122 = vsel %vm1741, %v2063, 0.0
      %v2123 = vadd.f32 %v2121, %v2122
      %v2124 = vsel %vm1741, %v2064, 0.0
      %v2125 = vadd.f32 %v2123, %v2124
      %v2126 = vsel %vm1741, %v2065, 0.0
      %v2127 = vadd.f32 %v2125, %v2126
      %v2128 = vsel %vm1741, %v2066, 0.0
      %v2129 = vadd.f32 %v2127, %v2128
      %2130 = vadd.xlane.f32.xlu0 %v2129
      %v2131 = vpop.xlane.xlu0 %2130
      %v2132 = vrot.slane %v2131, 4
      %v2133 = vadd.f32 %v2131, %v2132
      %v2134 = vrot.slane %v2133, 2
      %v2135 = vadd.f32 %v2133, %v2134
      %v2136 = vrot.slane %v2135, 1
      %v2137 = vadd.f32 %v2135, %v2136
      %s2138 = vtos %v2137
      %vm2139 = vcmp.eq.s32.totalorder %v611, 0
      %v2140 = vstv %s2138
      %v2141 = vsel %vm2139, %v2140, 0.0
      %2142 = vst [vmem:[#allocation4] sm:$0x1] %v2141
    $region21: #{tpu_custom_call.1} parent=1 // pred_fallthru
      _
    // Predicated region
    $region22: #{tpu_custom_call.1} parent=1 // pred_check
      _
    $region23: #{tpu_custom_call.1} parent=1 // pred_check_branch
      %2144 = sbr.rel (0) target = $region25
    $region24: #{tpu_custom_call.1} parent=1 // pred_region
      %s2146 = ssub.s32 16, 16
      %2147 = vsyncadd [#allocation5], %s2146
      %s2149 = sshll.u32 [#allocation4], 4
      %s2150 = int_to_ptr.vmem [resolvable:$true] %s2149
      %2152 = dma.vmem_to_hbm [thread:$0]  %s2150, 16, %s3, [#allocation5]
    $region25: #{tpu_custom_call.1} parent=1 // pred_fallthru
      _
    // Predicated region
    $region26: #{tpu_custom_call.1} parent=1 // pred_check
      _
    $region27: #{tpu_custom_call.1} parent=1 // pred_check_branch
      %2154 = sbr.rel (0) target = $region29
    $region28: #{tpu_custom_call.1} parent=1 // pred_region
      %2155 = dma.done [#allocation5], 16
    $region29: #{tpu_custom_call.1} parent=1 // pred_fallthru
      _
    %2156 = vsyncpa [#allocation5], 1

</llo_original>
